<compile_context>
chip_gen: v6e
topology: v6e:2x2x1
jax: 0.10.0
libtpu: 0.0.40
codegen_flags: <defaults>
</compile_context>

<pallas_src>
import jax
import jax.numpy as jnp
from jax.experimental import pallas as pl
from jax.experimental.pallas import tpu as pltpu


# ----------------------------- Pallas kernel --------------------------------


def recanet_kernel(ui_ref, hist_ref,
                   w_ui_ref, w_uih_h_ref,
                   w_ih_ref, w_hh_ref,
                   w_d1_ref, w_d2_ref,
                   b_pack_ref,
                   out_ref,
                   xs_ref, gin_ref, hs_ref):
    f32 = jnp.float32
    bf16 = jnp.bfloat16

    TB = ui_ref.shape[0]
    T = hist_ref.shape[1]          # history_len
    H = w_hh_ref.shape[0]          # lstm hidden
    H_ui = w_ui_ref.shape[1]
    H_uih = w_uih_h_ref.shape[1]
    D1 = w_d1_ref.shape[1]
    D2 = w_d2_ref.shape[1]

    # Packed 1-row params:
    # [b_ui, b_uih, w_uih_s, b_lstm, b_d1, b_d2, b_out, w_out_row]
    bp = b_pack_ref[...]
    b_ui = bp[0:1, :H_ui]
    b_uih = bp[1:2, :H_uih]
    w_s = bp[2:3, :H_uih]
    b_lstm = bp[3:4, :4 * H]
    b_d1 = bp[4:5, :D1]
    b_d2 = bp[5:6, :D2]
    b_out = bp[6:7, 0:1]
    w_out_row = bp[7:8, :D2]

    ui = ui_ref[...].astype(f32)          # (TB, D_item + D_user)
    hist = hist_ref[...].astype(f32)      # (TB, T)

    # user_item_fc + ReLU
    ui_h = jnp.maximum(
        jnp.dot(ui, w_ui_ref[...], preferred_element_type=f32) + b_ui, 0.0)

    # user_item_history_fc split: hidden part (shared across steps) + the
    # scalar history channel (rank-1 update per step).
    base = jnp.dot(ui_h, w_uih_h_ref[...], preferred_element_type=f32) + b_uih

    # ---- step inputs straight into a bf16 VMEM scratch (no concat copies) ----
    for t in range(T):
        x_t = jnp.maximum(base + hist[:, t:t + 1] * w_s, 0.0)
        xs_ref[t * TB:(t + 1) * TB, :] = x_t.astype(bf16)

    # ---- hoisted input projection: ONE bf16 matmul for all T steps ----------
    gin_ref[...] = (jnp.dot(xs_ref[...], w_ih_ref[...],
                            preferred_element_type=f32) + b_lstm)   # (T*TB, 4H)

    # ---- serial LSTM recurrence (gates packed host-side as [i | f | o | g]) -
    # NOTE: T is small (<= 16) here; for much larger history_len switch this
    # unrolled Python loop to lax.fori_loop to bound vreg live ranges.
    h = jnp.zeros((TB, H), f32)
    c = jnp.zeros((TB, H), f32)
    for t in range(T):
        gates = gin_ref[t * TB:(t + 1) * TB, :] + jnp.dot(
            h.astype(bf16), w_hh_ref[...], preferred_element_type=f32)  # (TB,4H)
        sfo = jax.nn.sigmoid(gates[:, :3 * H])     # one wide sigmoid (i,f,o)
        i_g = sfo[:, :H]
        f_g = sfo[:, H:2 * H]
        o_g = sfo[:, 2 * H:3 * H]
        g_g = jnp.tanh(gates[:, 3 * H:])           # one tanh (g)
        c = f_g * c + i_g * g_g
        h = o_g * jnp.tanh(c)
        hs_ref[t] = h                              # (TB, H) into VMEM scratch

    # ---- attention over time: one shot on the (T, TB, H) scratch ------------
    hs = hs_ref[...]                                               # (T, TB, H)
    logits = jnp.sum(hs * h[None, :, :], axis=-1, keepdims=True)   # (T, TB, 1)
    m = jnp.max(logits, axis=0, keepdims=True)
    e = jnp.exp(logits - m)
    denom = jnp.sum(e, axis=0, keepdims=True)                      # (1, TB, 1)
    p = e * pl.reciprocal(denom, approx=True)                      # softmax
    context = jnp.sum(p * hs, axis=0)                              # (TB, H)

    # ---- dense heads ---------------------------------------------------------
    d1 = jnp.maximum(
        jnp.dot(context, w_d1_ref[...], preferred_element_type=f32) + b_d1, 0.0)
    d2 = jnp.maximum(
        jnp.dot(d1, w_d2_ref[...], preferred_element_type=f32) + b_d2, 0.0)

    # Lane-dense epilogue: (1, D2) @ (D2, TB) -> (1, TB); batch on the lane
    # axis so the output store is a dense row (no N=1 matmul, no masked vst).
    pred = jnp.dot(w_out_row, d2.T, preferred_element_type=f32) + b_out
    out_ref[...] = jax.nn.sigmoid(pred)[None].astype(out_ref.dtype)  # (1,1,TB)


# ------------------------------ host wrapper ---------------------------------


def _reorder_gates_ifgo_to_ifog(a, H):
    """Re-pack 4H gate columns from PyTorch order (i,f,g,o) to (i,f,o,g)."""
    i = a[..., :H]
    f = a[..., H:2 * H]
    g = a[..., 2 * H:3 * H]
    o = a[..., 3 * H:4 * H]
    return jnp.concatenate([i, f, o, g], axis=-1)


def _pick_batch_tile(batch):
    # Small batches: one grid step (no per-step overhead).  Large batches: the
    # biggest tile <= 1024 that divides the batch, and at least 2 tiles once
    # batch >= 256 so both v7x TensorCores get work (harmless on 1-TC chips).
    # 1024 rows keep the per-tile VMEM footprint (xs/gates/hs scratches plus
    # attention temporaries) comfortably inside the raised 48 MiB VMEM limit.
    if batch <= 128:
        return batch
    cap = batch // 2 if batch >= 256 else batch
    cap = min(cap, 1024)
    for tb in (1024, 512, 256, 128, 64, 32, 16, 8):
        if tb <= cap and batch % tb == 0:
            return tb
    return batch


def recanet_attention_forward(item_input, user_input, history_input, params,
                              *, lstm_hidden, batch_tile=None):
    # Embedding gather is glue (plain JAX).
    item_embed = jnp.take(params["item_emb"], item_input.astype(jnp.int32), axis=0)
    user_embed = jnp.take(params["user_emb"], user_input.astype(jnp.int32), axis=0)
    ui_embed = jnp.concatenate([item_embed, user_embed], axis=1)   # (B, D_item + D_user)
    history = history_input.astype(jnp.float32)                    # (B, T)

    B = ui_embed.shape[0]
    T = history.shape[1]
    H = lstm_hidden
    H_uih = params["w_uih_h"].shape[1]
    TB = batch_tile if batch_tile is not None else _pick_batch_tile(B)
    assert B % TB == 0, "batch must be divisible by batch_tile"
    assert TB == B or TB % 8 == 0, "batch_tile must be a multiple of 8 (or == batch)"
    grid_n = B // TB

    # LSTM gate columns re-packed to [i | f | o | g]; MXU operands in bf16.
    w_ih = _reorder_gates_ifgo_to_ifog(params["w_ih"], H).astype(jnp.bfloat16)
    w_hh = _reorder_gates_ifgo_to_ifog(params["w_hh"], H).astype(jnp.bfloat16)
    b_lstm = _reorder_gates_ifgo_to_ifog(params["b_lstm"], H)

    # Pack all 1-row parameters (incl. w_out^T) into a single (8, width) slab.
    rows = [params["b_ui"], params["b_uih"], params["w_uih_s"], b_lstm,
            params["b_d1"], params["b_d2"], params["b_out"],
            params["w_out"].reshape(1, -1)]
    width = max(int(r.shape[1]) for r in rows)
    width = ((width + 127) // 128) * 128
    b_pack = jnp.concatenate(
        [jnp.pad(r.astype(jnp.float32), ((0, 0), (0, width - r.shape[1])))
         for r in rows], axis=0)

    def batch_spec(shape):
        return pl.BlockSpec((TB,) + shape[1:], lambda i: (i,) + (0,) * (len(shape) - 1))

    def weight_spec(shape):
        return pl.BlockSpec(shape, lambda i: (0,) * len(shape))

    weight_args = (
        params["w_ui"], params["w_uih_h"],
        w_ih, w_hh,
        params["w_d1"], params["w_d2"],
        b_pack,
    )

    out = pl.pallas_call(
        recanet_kernel,
        out_shape=jax.ShapeDtypeStruct((grid_n, 1, TB), jnp.float32),
        grid_spec=pltpu.PrefetchScalarGridSpec(
            num_scalar_prefetch=0,
            grid=(grid_n,),
            in_specs=[batch_spec(ui_embed.shape), batch_spec(history.shape)]
                     + [weight_spec(w.shape) for w in weight_args],
            out_specs=pl.BlockSpec((1, 1, TB), lambda i: (i, 0, 0)),
            scratch_shapes=[
                pltpu.VMEM((T * TB, H_uih), jnp.bfloat16),   # xs  (step inputs)
                pltpu.VMEM((T * TB, 4 * H), jnp.float32),    # gin (input gates)
                pltpu.VMEM((T, TB, H), jnp.float32),         # hs  (hidden states)
            ],
        ),
        compiler_params=pltpu.CompilerParams(
            dimension_semantics=("parallel",),
            vmem_limit_bytes=48 * 1024 * 1024),
    )(ui_embed, history, *weight_args)

    return out.reshape(-1)


# --------------------------- pure-JAX reference -------------------------------


def recanet_attention_reference(item_input, user_input, history_input, params,
                                *, history_len, lstm_hidden):
    item_embed = jnp.take(params["item_emb"], item_input.astype(jnp.int32), axis=0)
    user_embed = jnp.take(params["user_emb"], user_input.astype(jnp.int32), axis=0)
    ui = jnp.concatenate([item_embed, user_embed], axis=1)
    hist = history_input.astype(jnp.float32)

    ui_h = jax.nn.relu(ui @ params["w_ui"] + params["b_ui"])
    base = ui_h @ params["w_uih_h"] + params["b_uih"]

    B = ui.shape[0]
    H = lstm_hidden
    h = jnp.zeros((B, H), jnp.float32)
    c = jnp.zeros((B, H), jnp.float32)
    hs = []
    for t in range(history_len):
        x_t = jax.nn.relu(base + hist[:, t:t + 1] * params["w_uih_s"])
        gates = x_t @ params["w_ih"] + h @ params["w_hh"] + params["b_lstm"]
        i_g = jax.nn.sigmoid(gates[:, :H])
        f_g = jax.nn.sigmoid(gates[:, H:2 * H])
        g_g = jnp.tanh(gates[:, 2 * H:3 * H])
        o_g = jax.nn.sigmoid(gates[:, 3 * H:])
        c = f_g * c + i_g * g_g
        h = o_g * jnp.tanh(c)
        hs.append(h)
    hs_stack = jnp.stack(hs, axis=1)                       # (B, T, H)
    logits = jnp.einsum("bth,bh->bt", hs_stack, h)
    p = jax.nn.softmax(logits, axis=1)
    context = jnp.einsum("bth,bt->bh", hs_stack, p)
    d1 = jax.nn.relu(context @ params["w_d1"] + params["b_d1"])
    d2 = jax.nn.relu(d1 @ params["w_d2"] + params["b_d2"])
    pred = d2 @ params["w_out"] + params["b_out"]
    return jax.nn.sigmoid(pred.reshape(-1))


# ----------------------------------- main -------------------------------------


if __name__ == "__main__":
    # Model hyper-parameters (small, consistent with the module's __init__).
    num_items = 50
    item_embed_size = 16
    num_users = 40
    user_embed_size = 16
    history_len = 8
    user_item_hidden_size = 32
    user_item_history_hidden_size = 32
    lstm_hidden_size = 32
    dense_1_hidden_size = 32
    dense_2_hidden_size = 16
    batch = 16

    key = jax.random.PRNGKey(0)
    keys = jax.random.split(key, 20)

    def init(k, shape, scale=0.1):
        return (scale * jax.random.normal(k, shape)).astype(jnp.float32)

    H = lstm_hidden_size
    params = {
        "item_emb": init(keys[0], (num_items, item_embed_size)),
        "user_emb": init(keys[1], (num_users, user_embed_size)),
        # user_item_fc
        "w_ui": init(keys[2], (item_embed_size + user_embed_size, user_item_hidden_size)),
        "b_ui": init(keys[3], (1, user_item_hidden_size)),
        # user_item_history_fc split into [hidden part | history-scalar row]
        "w_uih_h": init(keys[4], (user_item_hidden_size, user_item_history_hidden_size)),
        "w_uih_s": init(keys[5], (1, user_item_history_hidden_size)),
        "b_uih": init(keys[6], (1, user_item_history_hidden_size)),
        # LSTM (PyTorch gate order i, f, g, o; combined bias = b_ih + b_hh)
        "w_ih": init(keys[7], (user_item_history_hidden_size, 4 * H)),
        "w_hh": init(keys[8], (H, 4 * H)),
        "b_lstm": init(keys[9], (1, 4 * H)),
        # dense heads
        "w_d1": init(keys[10], (H, dense_1_hidden_size)),
        "b_d1": init(keys[11], (1, dense_1_hidden_size)),
        "w_d2": init(keys[12], (dense_1_hidden_size, dense_2_hidden_size)),
        "b_d2": init(keys[13], (1, dense_2_hidden_size)),
        "w_out": init(keys[14], (dense_2_hidden_size, 1)),
        "b_out": init(keys[15], (1, 1)),
    }

    item_input = jax.random.randint(keys[16], (batch,), 0, num_items)
    user_input = jax.random.randint(keys[17], (batch,), 0, num_users)
    history_input = jax.random.bernoulli(keys[18], 0.5, (batch, history_len)).astype(jnp.float32)

    out = recanet_attention_forward(
        item_input, user_input, history_input, params,
        lstm_hidden=lstm_hidden_size)
    out = jax.block_until_ready(out)

    ref = recanet_attention_reference(
        item_input, user_input, history_input, params,
        history_len=history_len, lstm_hidden=lstm_hidden_size)
    ref = jax.block_until_ready(ref)

    assert out.shape == (batch,)
    # bf16 MXU operands + approx reciprocal in the softmax -> relaxed tolerance
    # vs. the all-f32 reference.
    assert jnp.allclose(out, ref, atol=1e-2, rtol=1e-2), (out, ref)
    print("KERNEL_OK")
</pallas_src>

<mosaic_0001>
module attributes {stable_mosaic.version = 11 : i64} {
  func.func @recanet_kernel(%arg0: i32, %arg1: memref<16x32xf32, #tpu.memory_space<vmem>>, %arg2: memref<16x8xf32, #tpu.memory_space<vmem>>, %arg3: memref<32x32xf32, #tpu.memory_space<vmem>>, %arg4: memref<32x32xf32, #tpu.memory_space<vmem>>, %arg5: memref<32x128xbf16, #tpu.memory_space<vmem>>, %arg6: memref<32x128xbf16, #tpu.memory_space<vmem>>, %arg7: memref<32x32xf32, #tpu.memory_space<vmem>>, %arg8: memref<32x16xf32, #tpu.memory_space<vmem>>, %arg9: memref<8x128xf32, #tpu.memory_space<vmem>>, %arg10: memref<1x1x16xf32, #tpu.memory_space<vmem>>, %arg11: memref<128x32xbf16, #tpu.memory_space<vmem>>, %arg12: memref<128x128xf32, #tpu.memory_space<vmem>>, %arg13: memref<8x16x32xf32, #tpu.memory_space<vmem>>) attributes {dimension_semantics = [#tpu.dimension_semantics<parallel>], iteration_bounds = array<i64: 1>, scalar_prefetch = 0 : i64, scratch_operands = 3 : i64, tpu.core_type = #tpu.core_type<tc>, window_params = [{transform_indices = @transform_0, window_bounds = array<i64: 16, 32>}, {transform_indices = @transform_1, window_bounds = array<i64: 16, 8>}, {pipeline_mode = #tpu.pipeline_mode<synchronous>, transform_indices = @transform_2, window_bounds = array<i64: 32, 32>}, {pipeline_mode = #tpu.pipeline_mode<synchronous>, transform_indices = @transform_3, window_bounds = array<i64: 32, 32>}, {pipeline_mode = #tpu.pipeline_mode<synchronous>, transform_indices = @transform_4, window_bounds = array<i64: 32, 128>}, {pipeline_mode = #tpu.pipeline_mode<synchronous>, transform_indices = @transform_5, window_bounds = array<i64: 32, 128>}, {pipeline_mode = #tpu.pipeline_mode<synchronous>, transform_indices = @transform_6, window_bounds = array<i64: 32, 32>}, {pipeline_mode = #tpu.pipeline_mode<synchronous>, transform_indices = @transform_7, window_bounds = array<i64: 32, 16>}, {pipeline_mode = #tpu.pipeline_mode<synchronous>, transform_indices = @transform_8, window_bounds = array<i64: 8, 128>}, {transform_indices = @transform_9, window_bounds = array<i64: 1, 1, 16>}]} {
    %c0 = arith.constant 0 : index
    %c0_0 = arith.constant 0 : index
    %0 = vector.load %arg9[%c0, %c0_0] : memref<8x128xf32, #tpu.memory_space<vmem>>, vector<8x128xf32>
    %1 = vector.extract_strided_slice %0 {offsets = [0, 0], sizes = [1, 32], strides = [1, 1]} : vector<8x128xf32> to vector<1x32xf32>
    %2 = vector.extract_strided_slice %0 {offsets = [1, 0], sizes = [1, 32], strides = [1, 1]} : vector<8x128xf32> to vector<1x32xf32>
    %3 = vector.extract_strided_slice %0 {offsets = [2, 0], sizes = [1, 32], strides = [1, 1]} : vector<8x128xf32> to vector<1x32xf32>
    %4 = vector.extract_strided_slice %0 {offsets = [3, 0], sizes = [1, 128], strides = [1, 1]} : vector<8x128xf32> to vector<1x128xf32>
    %5 = vector.extract_strided_slice %0 {offsets = [4, 0], sizes = [1, 32], strides = [1, 1]} : vector<8x128xf32> to vector<1x32xf32>
    %6 = vector.extract_strided_slice %0 {offsets = [5, 0], sizes = [1, 16], strides = [1, 1]} : vector<8x128xf32> to vector<1x16xf32>
    %7 = vector.extract_strided_slice %0 {offsets = [6, 0], sizes = [1, 1], strides = [1, 1]} : vector<8x128xf32> to vector<1x1xf32>
    %8 = vector.extract_strided_slice %0 {offsets = [7, 0], sizes = [1, 16], strides = [1, 1]} : vector<8x128xf32> to vector<1x16xf32>
    %c0_1 = arith.constant 0 : index
    %c0_2 = arith.constant 0 : index
    %9 = vector.load %arg1[%c0_1, %c0_2] : memref<16x32xf32, #tpu.memory_space<vmem>>, vector<16x32xf32>
    %c0_3 = arith.constant 0 : index
    %c0_4 = arith.constant 0 : index
    %10 = vector.load %arg2[%c0_3, %c0_4] : memref<16x8xf32, #tpu.memory_space<vmem>>, vector<16x8xf32>
    %c0_5 = arith.constant 0 : index
    %c0_6 = arith.constant 0 : index
    %11 = vector.load %arg3[%c0_5, %c0_6] : memref<32x32xf32, #tpu.memory_space<vmem>>, vector<32x32xf32>
    %cst = arith.constant dense<0.000000e+00> : vector<16x32xf32>
    %12 = tpu.matmul %9, %11, %cst {dimension_numbers = #tpu.dot_dimension_numbers<[1], [0], [0], [1], [0, 0, 1, 1], [], []>} : vector<16x32xf32>, vector<32x32xf32>, vector<16x32xf32> -> vector<16x32xf32>
    %13 = vector.broadcast %1 : vector<1x32xf32> to vector<16x32xf32>
    %14 = arith.addf %12, %13 : vector<16x32xf32>
    %cst_7 = arith.constant 0.000000e+00 : f32
    %15 = vector.broadcast %cst_7 : f32 to vector<16x32xf32>
    %16 = arith.maximumf %14, %15 : vector<16x32xf32>
    %c0_8 = arith.constant 0 : index
    %c0_9 = arith.constant 0 : index
    %17 = vector.load %arg4[%c0_8, %c0_9] : memref<32x32xf32, #tpu.memory_space<vmem>>, vector<32x32xf32>
    %cst_10 = arith.constant dense<0.000000e+00> : vector<16x32xf32>
    %18 = tpu.matmul %16, %17, %cst_10 {dimension_numbers = #tpu.dot_dimension_numbers<[1], [0], [0], [1], [0, 0, 1, 1], [], []>} : vector<16x32xf32>, vector<32x32xf32>, vector<16x32xf32> -> vector<16x32xf32>
    %19 = vector.broadcast %2 : vector<1x32xf32> to vector<16x32xf32>
    %20 = arith.addf %18, %19 : vector<16x32xf32>
    %21 = vector.extract_strided_slice %10 {offsets = [0, 0], sizes = [16, 1], strides = [1, 1]} : vector<16x8xf32> to vector<16x1xf32>
    %22 = vector.broadcast %21 : vector<16x1xf32> to vector<16x32xf32>
    %23 = vector.broadcast %3 : vector<1x32xf32> to vector<16x32xf32>
    %24 = arith.mulf %22, %23 : vector<16x32xf32>
    %25 = arith.addf %20, %24 : vector<16x32xf32>
    %cst_11 = arith.constant 0.000000e+00 : f32
    %26 = vector.broadcast %cst_11 : f32 to vector<16x32xf32>
    %27 = arith.maximumf %25, %26 : vector<16x32xf32>
    %28 = arith.truncf %27 : vector<16x32xf32> to vector<16x32xbf16>
    %c0_12 = arith.constant 0 : index
    %c0_13 = arith.constant 0 : index
    %29 = vector.load %arg11[%c0_12, %c0_13] : memref<128x32xbf16, #tpu.memory_space<vmem>>, vector<16x32xbf16>
    tpu.vector_store %arg11[%c0_12, %c0_13], %28 {strides = array<i32>} : memref<128x32xbf16, #tpu.memory_space<vmem>>, vector<16x32xbf16>,
    %30 = vector.extract_strided_slice %10 {offsets = [0, 1], sizes = [16, 1], strides = [1, 1]} : vector<16x8xf32> to vector<16x1xf32>
    %31 = vector.broadcast %30 : vector<16x1xf32> to vector<16x32xf32>
    %32 = vector.broadcast %3 : vector<1x32xf32> to vector<16x32xf32>
    %33 = arith.mulf %31, %32 : vector<16x32xf32>
    %34 = arith.addf %20, %33 : vector<16x32xf32>
    %cst_14 = arith.constant 0.000000e+00 : f32
    %35 = vector.broadcast %cst_14 : f32 to vector<16x32xf32>
    %36 = arith.maximumf %34, %35 : vector<16x32xf32>
    %37 = arith.truncf %36 : vector<16x32xf32> to vector<16x32xbf16>
    %c16 = arith.constant 16 : index
    %c0_15 = arith.constant 0 : index
    %38 = vector.load %arg11[%c16, %c0_15] : memref<128x32xbf16, #tpu.memory_space<vmem>>, vector<16x32xbf16>
    tpu.vector_store %arg11[%c16, %c0_15], %37 {strides = array<i32>} : memref<128x32xbf16, #tpu.memory_space<vmem>>, vector<16x32xbf16>,
    %39 = vector.extract_strided_slice %10 {offsets = [0, 2], sizes = [16, 1], strides = [1, 1]} : vector<16x8xf32> to vector<16x1xf32>
    %40 = vector.broadcast %39 : vector<16x1xf32> to vector<16x32xf32>
    %41 = vector.broadcast %3 : vector<1x32xf32> to vector<16x32xf32>
    %42 = arith.mulf %40, %41 : vector<16x32xf32>
    %43 = arith.addf %20, %42 : vector<16x32xf32>
    %cst_16 = arith.constant 0.000000e+00 : f32
    %44 = vector.broadcast %cst_16 : f32 to vector<16x32xf32>
    %45 = arith.maximumf %43, %44 : vector<16x32xf32>
    %46 = arith.truncf %45 : vector<16x32xf32> to vector<16x32xbf16>
    %c32 = arith.constant 32 : index
    %c0_17 = arith.constant 0 : index
    %47 = vector.load %arg11[%c32, %c0_17] : memref<128x32xbf16, #tpu.memory_space<vmem>>, vector<16x32xbf16>
    tpu.vector_store %arg11[%c32, %c0_17], %46 {strides = array<i32>} : memref<128x32xbf16, #tpu.memory_space<vmem>>, vector<16x32xbf16>,
    %48 = vector.extract_strided_slice %10 {offsets = [0, 3], sizes = [16, 1], strides = [1, 1]} : vector<16x8xf32> to vector<16x1xf32>
    %49 = vector.broadcast %48 : vector<16x1xf32> to vector<16x32xf32>
    %50 = vector.broadcast %3 : vector<1x32xf32> to vector<16x32xf32>
    %51 = arith.mulf %49, %50 : vector<16x32xf32>
    %52 = arith.addf %20, %51 : vector<16x32xf32>
    %cst_18 = arith.constant 0.000000e+00 : f32
    %53 = vector.broadcast %cst_18 : f32 to vector<16x32xf32>
    %54 = arith.maximumf %52, %53 : vector<16x32xf32>
    %55 = arith.truncf %54 : vector<16x32xf32> to vector<16x32xbf16>
    %c48 = arith.constant 48 : index
    %c0_19 = arith.constant 0 : index
    %56 = vector.load %arg11[%c48, %c0_19] : memref<128x32xbf16, #tpu.memory_space<vmem>>, vector<16x32xbf16>
    tpu.vector_store %arg11[%c48, %c0_19], %55 {strides = array<i32>} : memref<128x32xbf16, #tpu.memory_space<vmem>>, vector<16x32xbf16>,
    %57 = vector.extract_strided_slice %10 {offsets = [0, 4], sizes = [16, 1], strides = [1, 1]} : vector<16x8xf32> to vector<16x1xf32>
    %58 = vector.broadcast %57 : vector<16x1xf32> to vector<16x32xf32>
    %59 = vector.broadcast %3 : vector<1x32xf32> to vector<16x32xf32>
    %60 = arith.mulf %58, %59 : vector<16x32xf32>
    %61 = arith.addf %20, %60 : vector<16x32xf32>
    %cst_20 = arith.constant 0.000000e+00 : f32
    %62 = vector.broadcast %cst_20 : f32 to vector<16x32xf32>
    %63 = arith.maximumf %61, %62 : vector<16x32xf32>
    %64 = arith.truncf %63 : vector<16x32xf32> to vector<16x32xbf16>
    %c64 = arith.constant 64 : index
    %c0_21 = arith.constant 0 : index
    %65 = vector.load %arg11[%c64, %c0_21] : memref<128x32xbf16, #tpu.memory_space<vmem>>, vector<16x32xbf16>
    tpu.vector_store %arg11[%c64, %c0_21], %64 {strides = array<i32>} : memref<128x32xbf16, #tpu.memory_space<vmem>>, vector<16x32xbf16>,
    %66 = vector.extract_strided_slice %10 {offsets = [0, 5], sizes = [16, 1], strides = [1, 1]} : vector<16x8xf32> to vector<16x1xf32>
    %67 = vector.broadcast %66 : vector<16x1xf32> to vector<16x32xf32>
    %68 = vector.broadcast %3 : vector<1x32xf32> to vector<16x32xf32>
    %69 = arith.mulf %67, %68 : vector<16x32xf32>
    %70 = arith.addf %20, %69 : vector<16x32xf32>
    %cst_22 = arith.constant 0.000000e+00 : f32
    %71 = vector.broadcast %cst_22 : f32 to vector<16x32xf32>
    %72 = arith.maximumf %70, %71 : vector<16x32xf32>
    %73 = arith.truncf %72 : vector<16x32xf32> to vector<16x32xbf16>
    %c80 = arith.constant 80 : index
    %c0_23 = arith.constant 0 : index
    %74 = vector.load %arg11[%c80, %c0_23] : memref<128x32xbf16, #tpu.memory_space<vmem>>, vector<16x32xbf16>
    tpu.vector_store %arg11[%c80, %c0_23], %73 {strides = array<i32>} : memref<128x32xbf16, #tpu.memory_space<vmem>>, vector<16x32xbf16>,
    %75 = vector.extract_strided_slice %10 {offsets = [0, 6], sizes = [16, 1], strides = [1, 1]} : vector<16x8xf32> to vector<16x1xf32>
    %76 = vector.broadcast %75 : vector<16x1xf32> to vector<16x32xf32>
    %77 = vector.broadcast %3 : vector<1x32xf32> to vector<16x32xf32>
    %78 = arith.mulf %76, %77 : vector<16x32xf32>
    %79 = arith.addf %20, %78 : vector<16x32xf32>
    %cst_24 = arith.constant 0.000000e+00 : f32
    %80 = vector.broadcast %cst_24 : f32 to vector<16x32xf32>
    %81 = arith.maximumf %79, %80 : vector<16x32xf32>
    %82 = arith.truncf %81 : vector<16x32xf32> to vector<16x32xbf16>
    %c96 = arith.constant 96 : index
    %c0_25 = arith.constant 0 : index
    %83 = vector.load %arg11[%c96, %c0_25] : memref<128x32xbf16, #tpu.memory_space<vmem>>, vector<16x32xbf16>
    tpu.vector_store %arg11[%c96, %c0_25], %82 {strides = array<i32>} : memref<128x32xbf16, #tpu.memory_space<vmem>>, vector<16x32xbf16>,
    %84 = vector.extract_strided_slice %10 {offsets = [0, 7], sizes = [16, 1], strides = [1, 1]} : vector<16x8xf32> to vector<16x1xf32>
    %85 = vector.broadcast %84 : vector<16x1xf32> to vector<16x32xf32>
    %86 = vector.broadcast %3 : vector<1x32xf32> to vector<16x32xf32>
    %87 = arith.mulf %85, %86 : vector<16x32xf32>
    %88 = arith.addf %20, %87 : vector<16x32xf32>
    %cst_26 = arith.constant 0.000000e+00 : f32
    %89 = vector.broadcast %cst_26 : f32 to vector<16x32xf32>
    %90 = arith.maximumf %88, %89 : vector<16x32xf32>
    %91 = arith.truncf %90 : vector<16x32xf32> to vector<16x32xbf16>
    %c112 = arith.constant 112 : index
    %c0_27 = arith.constant 0 : index
    %92 = vector.load %arg11[%c112, %c0_27] : memref<128x32xbf16, #tpu.memory_space<vmem>>, vector<16x32xbf16>
    tpu.vector_store %arg11[%c112, %c0_27], %91 {strides = array<i32>} : memref<128x32xbf16, #tpu.memory_space<vmem>>, vector<16x32xbf16>,
    %c0_28 = arith.constant 0 : index
    %c0_29 = arith.constant 0 : index
    %93 = vector.load %arg11[%c0_28, %c0_29] : memref<128x32xbf16, #tpu.memory_space<vmem>>, vector<128x32xbf16>
    %c0_30 = arith.constant 0 : index
    %c0_31 = arith.constant 0 : index
    %94 = vector.load %arg5[%c0_30, %c0_31] : memref<32x128xbf16, #tpu.memory_space<vmem>>, vector<32x128xbf16>
    %cst_32 = arith.constant dense<0.000000e+00> : vector<128x128xf32>
    %95 = tpu.matmul %93, %94, %cst_32 {dimension_numbers = #tpu.dot_dimension_numbers<[1], [0], [0], [1], [0, 0, 1, 1], [], []>} : vector<128x32xbf16>, vector<32x128xbf16>, vector<128x128xf32> -> vector<128x128xf32>
    %96 = vector.broadcast %4 : vector<1x128xf32> to vector<128x128xf32>
    %97 = arith.addf %95, %96 : vector<128x128xf32>
    %c0_33 = arith.constant 0 : index
    %c0_34 = arith.constant 0 : index
    %98 = vector.load %arg12[%c0_33, %c0_34] : memref<128x128xf32, #tpu.memory_space<vmem>>, vector<128x128xf32>
    tpu.vector_store %arg12[%c0_33, %c0_34], %97 {strides = array<i32>} : memref<128x128xf32, #tpu.memory_space<vmem>>, vector<128x128xf32>,
    %cst_35 = arith.constant 0.000000e+00 : f32
    %99 = vector.broadcast %cst_35 : f32 to vector<16x32xf32>
    %cst_36 = arith.constant 0.000000e+00 : f32
    %100 = vector.broadcast %cst_36 : f32 to vector<16x32xf32>
    %c0_37 = arith.constant 0 : index
    %c0_38 = arith.constant 0 : index
    %101 = vector.load %arg12[%c0_37, %c0_38] : memref<128x128xf32, #tpu.memory_space<vmem>>, vector<16x128xf32>
    %102 = arith.truncf %99 : vector<16x32xf32> to vector<16x32xbf16>
    %c0_39 = arith.constant 0 : index
    %c0_40 = arith.constant 0 : index
    %103 = vector.load %arg6[%c0_39, %c0_40] : memref<32x128xbf16, #tpu.memory_space<vmem>>, vector<32x128xbf16>
    %cst_41 = arith.constant dense<0.000000e+00> : vector<16x128xf32>
    %104 = tpu.matmul %102, %103, %cst_41 {dimension_numbers = #tpu.dot_dimension_numbers<[1], [0], [0], [1], [0, 0, 1, 1], [], []>} : vector<16x32xbf16>, vector<32x128xbf16>, vector<16x128xf32> -> vector<16x128xf32>
    %105 = arith.addf %101, %104 : vector<16x128xf32>
    %106 = vector.extract_strided_slice %105 {offsets = [0, 0], sizes = [16, 96], strides = [1, 1]} : vector<16x128xf32> to vector<16x96xf32>
    %107 = arith.negf %106 : vector<16x96xf32>
    %108 = math.exp %107 : vector<16x96xf32>
    %cst_42 = arith.constant 1.000000e+00 : f32
    %109 = vector.broadcast %cst_42 : f32 to vector<16x96xf32>
    %110 = arith.addf %109, %108 : vector<16x96xf32>
    %111 = arith.divf %109, %110 : vector<16x96xf32>
    %112 = vector.extract_strided_slice %111 {offsets = [0, 0], sizes = [16, 32], strides = [1, 1]} : vector<16x96xf32> to vector<16x32xf32>
    %113 = vector.extract_strided_slice %111 {offsets = [0, 32], sizes = [16, 32], strides = [1, 1]} : vector<16x96xf32> to vector<16x32xf32>
    %114 = vector.extract_strided_slice %111 {offsets = [0, 64], sizes = [16, 32], strides = [1, 1]} : vector<16x96xf32> to vector<16x32xf32>
    %115 = vector.extract_strided_slice %105 {offsets = [0, 96], sizes = [16, 32], strides = [1, 1]} : vector<16x128xf32> to vector<16x32xf32>
    %116 = math.tanh %115 : vector<16x32xf32>
    %117 = arith.mulf %113, %100 : vector<16x32xf32>
    %118 = arith.mulf %112, %116 : vector<16x32xf32>
    %119 = arith.addf %117, %118 : vector<16x32xf32>
    %120 = math.tanh %119 : vector<16x32xf32>
    %121 = arith.mulf %114, %120 : vector<16x32xf32>
    %c0_43 = arith.constant 0 : index
    %c0_44 = arith.constant 0 : index
    %c0_45 = arith.constant 0 : index
    %122 = vector.load %arg13[%c0_43, %c0_44, %c0_45] : memref<8x16x32xf32, #tpu.memory_space<vmem>>, vector<1x16x32xf32>
    %123 = vector.shape_cast %122 : vector<1x16x32xf32> to vector<16x32xf32>
    %124 = vector.shape_cast %121 : vector<16x32xf32> to vector<1x16x32xf32>
    tpu.vector_store %arg13[%c0_43, %c0_44, %c0_45], %124 {strides = array<i32>} : memref<8x16x32xf32, #tpu.memory_space<vmem>>, vector<1x16x32xf32>,
    %c16_46 = arith.constant 16 : index
    %c0_47 = arith.constant 0 : index
    %125 = vector.load %arg12[%c16_46, %c0_47] : memref<128x128xf32, #tpu.memory_space<vmem>>, vector<16x128xf32>
    %126 = arith.truncf %121 : vector<16x32xf32> to vector<16x32xbf16>
    %c0_48 = arith.constant 0 : index
    %c0_49 = arith.constant 0 : index
    %127 = vector.load %arg6[%c0_48, %c0_49] : memref<32x128xbf16, #tpu.memory_space<vmem>>, vector<32x128xbf16>
    %cst_50 = arith.constant dense<0.000000e+00> : vector<16x128xf32>
    %128 = tpu.matmul %126, %127, %cst_50 {dimension_numbers = #tpu.dot_dimension_numbers<[1], [0], [0], [1], [0, 0, 1, 1], [], []>} : vector<16x32xbf16>, vector<32x128xbf16>, vector<16x128xf32> -> vector<16x128xf32>
    %129 = arith.addf %125, %128 : vector<16x128xf32>
    %130 = vector.extract_strided_slice %129 {offsets = [0, 0], sizes = [16, 96], strides = [1, 1]} : vector<16x128xf32> to vector<16x96xf32>
    %131 = arith.negf %130 : vector<16x96xf32>
    %132 = math.exp %131 : vector<16x96xf32>
    %cst_51 = arith.constant 1.000000e+00 : f32
    %133 = vector.broadcast %cst_51 : f32 to vector<16x96xf32>
    %134 = arith.addf %133, %132 : vector<16x96xf32>
    %135 = arith.divf %133, %134 : vector<16x96xf32>
    %136 = vector.extract_strided_slice %135 {offsets = [0, 0], sizes = [16, 32], strides = [1, 1]} : vector<16x96xf32> to vector<16x32xf32>
    %137 = vector.extract_strided_slice %135 {offsets = [0, 32], sizes = [16, 32], strides = [1, 1]} : vector<16x96xf32> to vector<16x32xf32>
    %138 = vector.extract_strided_slice %135 {offsets = [0, 64], sizes = [16, 32], strides = [1, 1]} : vector<16x96xf32> to vector<16x32xf32>
    %139 = vector.extract_strided_slice %129 {offsets = [0, 96], sizes = [16, 32], strides = [1, 1]} : vector<16x128xf32> to vector<16x32xf32>
    %140 = math.tanh %139 : vector<16x32xf32>
    %141 = arith.mulf %137, %119 : vector<16x32xf32>
    %142 = arith.mulf %136, %140 : vector<16x32xf32>
    %143 = arith.addf %141, %142 : vector<16x32xf32>
    %144 = math.tanh %143 : vector<16x32xf32>
    %145 = arith.mulf %138, %144 : vector<16x32xf32>
    %c1 = arith.constant 1 : index
    %c0_52 = arith.constant 0 : index
    %c0_53 = arith.constant 0 : index
    %146 = vector.load %arg13[%c1, %c0_52, %c0_53] : memref<8x16x32xf32, #tpu.memory_space<vmem>>, vector<1x16x32xf32>
    %147 = vector.shape_cast %146 : vector<1x16x32xf32> to vector<16x32xf32>
    %148 = vector.shape_cast %145 : vector<16x32xf32> to vector<1x16x32xf32>
    tpu.vector_store %arg13[%c1, %c0_52, %c0_53], %148 {strides = array<i32>} : memref<8x16x32xf32, #tpu.memory_space<vmem>>, vector<1x16x32xf32>,
    %c32_54 = arith.constant 32 : index
    %c0_55 = arith.constant 0 : index
    %149 = vector.load %arg12[%c32_54, %c0_55] : memref<128x128xf32, #tpu.memory_space<vmem>>, vector<16x128xf32>
    %150 = arith.truncf %145 : vector<16x32xf32> to vector<16x32xbf16>
    %c0_56 = arith.constant 0 : index
    %c0_57 = arith.constant 0 : index
    %151 = vector.load %arg6[%c0_56, %c0_57] : memref<32x128xbf16, #tpu.memory_space<vmem>>, vector<32x128xbf16>
    %cst_58 = arith.constant dense<0.000000e+00> : vector<16x128xf32>
    %152 = tpu.matmul %150, %151, %cst_58 {dimension_numbers = #tpu.dot_dimension_numbers<[1], [0], [0], [1], [0, 0, 1, 1], [], []>} : vector<16x32xbf16>, vector<32x128xbf16>, vector<16x128xf32> -> vector<16x128xf32>
    %153 = arith.addf %149, %152 : vector<16x128xf32>
    %154 = vector.extract_strided_slice %153 {offsets = [0, 0], sizes = [16, 96], strides = [1, 1]} : vector<16x128xf32> to vector<16x96xf32>
    %155 = arith.negf %154 : vector<16x96xf32>
    %156 = math.exp %155 : vector<16x96xf32>
    %cst_59 = arith.constant 1.000000e+00 : f32
    %157 = vector.broadcast %cst_59 : f32 to vector<16x96xf32>
    %158 = arith.addf %157, %156 : vector<16x96xf32>
    %159 = arith.divf %157, %158 : vector<16x96xf32>
    %160 = vector.extract_strided_slice %159 {offsets = [0, 0], sizes = [16, 32], strides = [1, 1]} : vector<16x96xf32> to vector<16x32xf32>
    %161 = vector.extract_strided_slice %159 {offsets = [0, 32], sizes = [16, 32], strides = [1, 1]} : vector<16x96xf32> to vector<16x32xf32>
    %162 = vector.extract_strided_slice %159 {offsets = [0, 64], sizes = [16, 32], strides = [1, 1]} : vector<16x96xf32> to vector<16x32xf32>
    %163 = vector.extract_strided_slice %153 {offsets = [0, 96], sizes = [16, 32], strides = [1, 1]} : vector<16x128xf32> to vector<16x32xf32>
    %164 = math.tanh %163 : vector<16x32xf32>
    %165 = arith.mulf %161, %143 : vector<16x32xf32>
    %166 = arith.mulf %160, %164 : vector<16x32xf32>
    %167 = arith.addf %165, %166 : vector<16x32xf32>
    %168 = math.tanh %167 : vector<16x32xf32>
    %169 = arith.mulf %162, %168 : vector<16x32xf32>
    %c2 = arith.constant 2 : index
    %c0_60 = arith.constant 0 : index
    %c0_61 = arith.constant 0 : index
    %170 = vector.load %arg13[%c2, %c0_60, %c0_61] : memref<8x16x32xf32, #tpu.memory_space<vmem>>, vector<1x16x32xf32>
    %171 = vector.shape_cast %170 : vector<1x16x32xf32> to vector<16x32xf32>
    %172 = vector.shape_cast %169 : vector<16x32xf32> to vector<1x16x32xf32>
    tpu.vector_store %arg13[%c2, %c0_60, %c0_61], %172 {strides = array<i32>} : memref<8x16x32xf32, #tpu.memory_space<vmem>>, vector<1x16x32xf32>,
    %c48_62 = arith.constant 48 : index
    %c0_63 = arith.constant 0 : index
    %173 = vector.load %arg12[%c48_62, %c0_63] : memref<128x128xf32, #tpu.memory_space<vmem>>, vector<16x128xf32>
    %174 = arith.truncf %169 : vector<16x32xf32> to vector<16x32xbf16>
    %c0_64 = arith.constant 0 : index
    %c0_65 = arith.constant 0 : index
    %175 = vector.load %arg6[%c0_64, %c0_65] : memref<32x128xbf16, #tpu.memory_space<vmem>>, vector<32x128xbf16>
    %cst_66 = arith.constant dense<0.000000e+00> : vector<16x128xf32>
    %176 = tpu.matmul %174, %175, %cst_66 {dimension_numbers = #tpu.dot_dimension_numbers<[1], [0], [0], [1], [0, 0, 1, 1], [], []>} : vector<16x32xbf16>, vector<32x128xbf16>, vector<16x128xf32> -> vector<16x128xf32>
    %177 = arith.addf %173, %176 : vector<16x128xf32>
    %178 = vector.extract_strided_slice %177 {offsets = [0, 0], sizes = [16, 96], strides = [1, 1]} : vector<16x128xf32> to vector<16x96xf32>
    %179 = arith.negf %178 : vector<16x96xf32>
    %180 = math.exp %179 : vector<16x96xf32>
    %cst_67 = arith.constant 1.000000e+00 : f32
    %181 = vector.broadcast %cst_67 : f32 to vector<16x96xf32>
    %182 = arith.addf %181, %180 : vector<16x96xf32>
    %183 = arith.divf %181, %182 : vector<16x96xf32>
    %184 = vector.extract_strided_slice %183 {offsets = [0, 0], sizes = [16, 32], strides = [1, 1]} : vector<16x96xf32> to vector<16x32xf32>
    %185 = vector.extract_strided_slice %183 {offsets = [0, 32], sizes = [16, 32], strides = [1, 1]} : vector<16x96xf32> to vector<16x32xf32>
    %186 = vector.extract_strided_slice %183 {offsets = [0, 64], sizes = [16, 32], strides = [1, 1]} : vector<16x96xf32> to vector<16x32xf32>
    %187 = vector.extract_strided_slice %177 {offsets = [0, 96], sizes = [16, 32], strides = [1, 1]} : vector<16x128xf32> to vector<16x32xf32>
    %188 = math.tanh %187 : vector<16x32xf32>
    %189 = arith.mulf %185, %167 : vector<16x32xf32>
    %190 = arith.mulf %184, %188 : vector<16x32xf32>
    %191 = arith.addf %189, %190 : vector<16x32xf32>
    %192 = math.tanh %191 : vector<16x32xf32>
    %193 = arith.mulf %186, %192 : vector<16x32xf32>
    %c3 = arith.constant 3 : index
    %c0_68 = arith.constant 0 : index
    %c0_69 = arith.constant 0 : index
    %194 = vector.load %arg13[%c3, %c0_68, %c0_69] : memref<8x16x32xf32, #tpu.memory_space<vmem>>, vector<1x16x32xf32>
    %195 = vector.shape_cast %194 : vector<1x16x32xf32> to vector<16x32xf32>
    %196 = vector.shape_cast %193 : vector<16x32xf32> to vector<1x16x32xf32>
    tpu.vector_store %arg13[%c3, %c0_68, %c0_69], %196 {strides = array<i32>} : memref<8x16x32xf32, #tpu.memory_space<vmem>>, vector<1x16x32xf32>,
    %c64_70 = arith.constant 64 : index
    %c0_71 = arith.constant 0 : index
    %197 = vector.load %arg12[%c64_70, %c0_71] : memref<128x128xf32, #tpu.memory_space<vmem>>, vector<16x128xf32>
    %198 = arith.truncf %193 : vector<16x32xf32> to vector<16x32xbf16>
    %c0_72 = arith.constant 0 : index
    %c0_73 = arith.constant 0 : index
    %199 = vector.load %arg6[%c0_72, %c0_73] : memref<32x128xbf16, #tpu.memory_space<vmem>>, vector<32x128xbf16>
    %cst_74 = arith.constant dense<0.000000e+00> : vector<16x128xf32>
    %200 = tpu.matmul %198, %199, %cst_74 {dimension_numbers = #tpu.dot_dimension_numbers<[1], [0], [0], [1], [0, 0, 1, 1], [], []>} : vector<16x32xbf16>, vector<32x128xbf16>, vector<16x128xf32> -> vector<16x128xf32>
    %201 = arith.addf %197, %200 : vector<16x128xf32>
    %202 = vector.extract_strided_slice %201 {offsets = [0, 0], sizes = [16, 96], strides = [1, 1]} : vector<16x128xf32> to vector<16x96xf32>
    %203 = arith.negf %202 : vector<16x96xf32>
    %204 = math.exp %203 : vector<16x96xf32>
    %cst_75 = arith.constant 1.000000e+00 : f32
    %205 = vector.broadcast %cst_75 : f32 to vector<16x96xf32>
    %206 = arith.addf %205, %204 : vector<16x96xf32>
    %207 = arith.divf %205, %206 : vector<16x96xf32>
    %208 = vector.extract_strided_slice %207 {offsets = [0, 0], sizes = [16, 32], strides = [1, 1]} : vector<16x96xf32> to vector<16x32xf32>
    %209 = vector.extract_strided_slice %207 {offsets = [0, 32], sizes = [16, 32], strides = [1, 1]} : vector<16x96xf32> to vector<16x32xf32>
    %210 = vector.extract_strided_slice %207 {offsets = [0, 64], sizes = [16, 32], strides = [1, 1]} : vector<16x96xf32> to vector<16x32xf32>
    %211 = vector.extract_strided_slice %201 {offsets = [0, 96], sizes = [16, 32], strides = [1, 1]} : vector<16x128xf32> to vector<16x32xf32>
    %212 = math.tanh %211 : vector<16x32xf32>
    %213 = arith.mulf %209, %191 : vector<16x32xf32>
    %214 = arith.mulf %208, %212 : vector<16x32xf32>
    %215 = arith.addf %213, %214 : vector<16x32xf32>
    %216 = math.tanh %215 : vector<16x32xf32>
    %217 = arith.mulf %210, %216 : vector<16x32xf32>
    %c4 = arith.constant 4 : index
    %c0_76 = arith.constant 0 : index
    %c0_77 = arith.constant 0 : index
    %218 = vector.load %arg13[%c4, %c0_76, %c0_77] : memref<8x16x32xf32, #tpu.memory_space<vmem>>, vector<1x16x32xf32>
    %219 = vector.shape_cast %218 : vector<1x16x32xf32> to vector<16x32xf32>
    %220 = vector.shape_cast %217 : vector<16x32xf32> to vector<1x16x32xf32>
    tpu.vector_store %arg13[%c4, %c0_76, %c0_77], %220 {strides = array<i32>} : memref<8x16x32xf32, #tpu.memory_space<vmem>>, vector<1x16x32xf32>,
    %c80_78 = arith.constant 80 : index
    %c0_79 = arith.constant 0 : index
    %221 = vector.load %arg12[%c80_78, %c0_79] : memref<128x128xf32, #tpu.memory_space<vmem>>, vector<16x128xf32>
    %222 = arith.truncf %217 : vector<16x32xf32> to vector<16x32xbf16>
    %c0_80 = arith.constant 0 : index
    %c0_81 = arith.constant 0 : index
    %223 = vector.load %arg6[%c0_80, %c0_81] : memref<32x128xbf16, #tpu.memory_space<vmem>>, vector<32x128xbf16>
    %cst_82 = arith.constant dense<0.000000e+00> : vector<16x128xf32>
    %224 = tpu.matmul %222, %223, %cst_82 {dimension_numbers = #tpu.dot_dimension_numbers<[1], [0], [0], [1], [0, 0, 1, 1], [], []>} : vector<16x32xbf16>, vector<32x128xbf16>, vector<16x128xf32> -> vector<16x128xf32>
    %225 = arith.addf %221, %224 : vector<16x128xf32>
    %226 = vector.extract_strided_slice %225 {offsets = [0, 0], sizes = [16, 96], strides = [1, 1]} : vector<16x128xf32> to vector<16x96xf32>
    %227 = arith.negf %226 : vector<16x96xf32>
    %228 = math.exp %227 : vector<16x96xf32>
    %cst_83 = arith.constant 1.000000e+00 : f32
    %229 = vector.broadcast %cst_83 : f32 to vector<16x96xf32>
    %230 = arith.addf %229, %228 : vector<16x96xf32>
    %231 = arith.divf %229, %230 : vector<16x96xf32>
    %232 = vector.extract_strided_slice %231 {offsets = [0, 0], sizes = [16, 32], strides = [1, 1]} : vector<16x96xf32> to vector<16x32xf32>
    %233 = vector.extract_strided_slice %231 {offsets = [0, 32], sizes = [16, 32], strides = [1, 1]} : vector<16x96xf32> to vector<16x32xf32>
    %234 = vector.extract_strided_slice %231 {offsets = [0, 64], sizes = [16, 32], strides = [1, 1]} : vector<16x96xf32> to vector<16x32xf32>
    %235 = vector.extract_strided_slice %225 {offsets = [0, 96], sizes = [16, 32], strides = [1, 1]} : vector<16x128xf32> to vector<16x32xf32>
    %236 = math.tanh %235 : vector<16x32xf32>
    %237 = arith.mulf %233, %215 : vector<16x32xf32>
    %238 = arith.mulf %232, %236 : vector<16x32xf32>
    %239 = arith.addf %237, %238 : vector<16x32xf32>
    %240 = math.tanh %239 : vector<16x32xf32>
    %241 = arith.mulf %234, %240 : vector<16x32xf32>
    %c5 = arith.constant 5 : index
    %c0_84 = arith.constant 0 : index
    %c0_85 = arith.constant 0 : index
    %242 = vector.load %arg13[%c5, %c0_84, %c0_85] : memref<8x16x32xf32, #tpu.memory_space<vmem>>, vector<1x16x32xf32>
    %243 = vector.shape_cast %242 : vector<1x16x32xf32> to vector<16x32xf32>
    %244 = vector.shape_cast %241 : vector<16x32xf32> to vector<1x16x32xf32>
    tpu.vector_store %arg13[%c5, %c0_84, %c0_85], %244 {strides = array<i32>} : memref<8x16x32xf32, #tpu.memory_space<vmem>>, vector<1x16x32xf32>,
    %c96_86 = arith.constant 96 : index
    %c0_87 = arith.constant 0 : index
    %245 = vector.load %arg12[%c96_86, %c0_87] : memref<128x128xf32, #tpu.memory_space<vmem>>, vector<16x128xf32>
    %246 = arith.truncf %241 : vector<16x32xf32> to vector<16x32xbf16>
    %c0_88 = arith.constant 0 : index
    %c0_89 = arith.constant 0 : index
    %247 = vector.load %arg6[%c0_88, %c0_89] : memref<32x128xbf16, #tpu.memory_space<vmem>>, vector<32x128xbf16>
    %cst_90 = arith.constant dense<0.000000e+00> : vector<16x128xf32>
    %248 = tpu.matmul %246, %247, %cst_90 {dimension_numbers = #tpu.dot_dimension_numbers<[1], [0], [0], [1], [0, 0, 1, 1], [], []>} : vector<16x32xbf16>, vector<32x128xbf16>, vector<16x128xf32> -> vector<16x128xf32>
    %249 = arith.addf %245, %248 : vector<16x128xf32>
    %250 = vector.extract_strided_slice %249 {offsets = [0, 0], sizes = [16, 96], strides = [1, 1]} : vector<16x128xf32> to vector<16x96xf32>
    %251 = arith.negf %250 : vector<16x96xf32>
    %252 = math.exp %251 : vector<16x96xf32>
    %cst_91 = arith.constant 1.000000e+00 : f32
    %253 = vector.broadcast %cst_91 : f32 to vector<16x96xf32>
    %254 = arith.addf %253, %252 : vector<16x96xf32>
    %255 = arith.divf %253, %254 : vector<16x96xf32>
    %256 = vector.extract_strided_slice %255 {offsets = [0, 0], sizes = [16, 32], strides = [1, 1]} : vector<16x96xf32> to vector<16x32xf32>
    %257 = vector.extract_strided_slice %255 {offsets = [0, 32], sizes = [16, 32], strides = [1, 1]} : vector<16x96xf32> to vector<16x32xf32>
    %258 = vector.extract_strided_slice %255 {offsets = [0, 64], sizes = [16, 32], strides = [1, 1]} : vector<16x96xf32> to vector<16x32xf32>
    %259 = vector.extract_strided_slice %249 {offsets = [0, 96], sizes = [16, 32], strides = [1, 1]} : vector<16x128xf32> to vector<16x32xf32>
    %260 = math.tanh %259 : vector<16x32xf32>
    %261 = arith.mulf %257, %239 : vector<16x32xf32>
    %262 = arith.mulf %256, %260 : vector<16x32xf32>
    %263 = arith.addf %261, %262 : vector<16x32xf32>
    %264 = math.tanh %263 : vector<16x32xf32>
    %265 = arith.mulf %258, %264 : vector<16x32xf32>
    %c6 = arith.constant 6 : index
    %c0_92 = arith.constant 0 : index
    %c0_93 = arith.constant 0 : index
    %266 = vector.load %arg13[%c6, %c0_92, %c0_93] : memref<8x16x32xf32, #tpu.memory_space<vmem>>, vector<1x16x32xf32>
    %267 = vector.shape_cast %266 : vector<1x16x32xf32> to vector<16x32xf32>
    %268 = vector.shape_cast %265 : vector<16x32xf32> to vector<1x16x32xf32>
    tpu.vector_store %arg13[%c6, %c0_92, %c0_93], %268 {strides = array<i32>} : memref<8x16x32xf32, #tpu.memory_space<vmem>>, vector<1x16x32xf32>,
    %c112_94 = arith.constant 112 : index
    %c0_95 = arith.constant 0 : index
    %269 = vector.load %arg12[%c112_94, %c0_95] : memref<128x128xf32, #tpu.memory_space<vmem>>, vector<16x128xf32>
    %270 = arith.truncf %265 : vector<16x32xf32> to vector<16x32xbf16>
    %c0_96 = arith.constant 0 : index
    %c0_97 = arith.constant 0 : index
    %271 = vector.load %arg6[%c0_96, %c0_97] : memref<32x128xbf16, #tpu.memory_space<vmem>>, vector<32x128xbf16>
    %cst_98 = arith.constant dense<0.000000e+00> : vector<16x128xf32>
    %272 = tpu.matmul %270, %271, %cst_98 {dimension_numbers = #tpu.dot_dimension_numbers<[1], [0], [0], [1], [0, 0, 1, 1], [], []>} : vector<16x32xbf16>, vector<32x128xbf16>, vector<16x128xf32> -> vector<16x128xf32>
    %273 = arith.addf %269, %272 : vector<16x128xf32>
    %274 = vector.extract_strided_slice %273 {offsets = [0, 0], sizes = [16, 96], strides = [1, 1]} : vector<16x128xf32> to vector<16x96xf32>
    %275 = arith.negf %274 : vector<16x96xf32>
    %276 = math.exp %275 : vector<16x96xf32>
    %cst_99 = arith.constant 1.000000e+00 : f32
    %277 = vector.broadcast %cst_99 : f32 to vector<16x96xf32>
    %278 = arith.addf %277, %276 : vector<16x96xf32>
    %279 = arith.divf %277, %278 : vector<16x96xf32>
    %280 = vector.extract_strided_slice %279 {offsets = [0, 0], sizes = [16, 32], strides = [1, 1]} : vector<16x96xf32> to vector<16x32xf32>
    %281 = vector.extract_strided_slice %279 {offsets = [0, 32], sizes = [16, 32], strides = [1, 1]} : vector<16x96xf32> to vector<16x32xf32>
    %282 = vector.extract_strided_slice %279 {offsets = [0, 64], sizes = [16, 32], strides = [1, 1]} : vector<16x96xf32> to vector<16x32xf32>
    %283 = vector.extract_strided_slice %273 {offsets = [0, 96], sizes = [16, 32], strides = [1, 1]} : vector<16x128xf32> to vector<16x32xf32>
    %284 = math.tanh %283 : vector<16x32xf32>
    %285 = arith.mulf %281, %263 : vector<16x32xf32>
    %286 = arith.mulf %280, %284 : vector<16x32xf32>
    %287 = arith.addf %285, %286 : vector<16x32xf32>
    %288 = math.tanh %287 : vector<16x32xf32>
    %289 = arith.mulf %282, %288 : vector<16x32xf32>
    %c7 = arith.constant 7 : index
    %c0_100 = arith.constant 0 : index
    %c0_101 = arith.constant 0 : index
    %290 = vector.load %arg13[%c7, %c0_100, %c0_101] : memref<8x16x32xf32, #tpu.memory_space<vmem>>, vector<1x16x32xf32>
    %291 = vector.shape_cast %290 : vector<1x16x32xf32> to vector<16x32xf32>
    %292 = vector.shape_cast %289 : vector<16x32xf32> to vector<1x16x32xf32>
    tpu.vector_store %arg13[%c7, %c0_100, %c0_101], %292 {strides = array<i32>} : memref<8x16x32xf32, #tpu.memory_space<vmem>>, vector<1x16x32xf32>,
    %c0_102 = arith.constant 0 : index
    %c0_103 = arith.constant 0 : index
    %c0_104 = arith.constant 0 : index
    %293 = vector.load %arg13[%c0_102, %c0_103, %c0_104] : memref<8x16x32xf32, #tpu.memory_space<vmem>>, vector<8x16x32xf32>
    %294 = vector.shape_cast %289 : vector<16x32xf32> to vector<1x16x32xf32>
    %295 = vector.broadcast %294 : vector<1x16x32xf32> to vector<8x16x32xf32>
    %296 = arith.mulf %293, %295 : vector<8x16x32xf32>
    %cst_105 = arith.constant dense<0.000000e+00> : vector<8x16xf32>
    %297 = vector.multi_reduction <add>, %296, %cst_105 [2] : vector<8x16x32xf32> to vector<8x16xf32>
    %298 = vector.shape_cast %297 : vector<8x16xf32> to vector<8x16x1xf32>
    %cst_106 = arith.constant dense<0xFF800000> : vector<16x1xf32>
    %299 = vector.multi_reduction <maximumf>, %298, %cst_106 [0] : vector<8x16x1xf32> to vector<16x1xf32>
    %300 = vector.shape_cast %299 : vector<16x1xf32> to vector<1x16x1xf32>
    %301 = vector.broadcast %300 : vector<1x16x1xf32> to vector<8x16x1xf32>
    %302 = arith.subf %298, %301 : vector<8x16x1xf32>
    %303 = math.exp %302 : vector<8x16x1xf32>
    %cst_107 = arith.constant dense<0.000000e+00> : vector<16x1xf32>
    %304 = vector.multi_reduction <add>, %303, %cst_107 [0] : vector<8x16x1xf32> to vector<16x1xf32>
    %305 = vector.shape_cast %304 : vector<16x1xf32> to vector<1x16x1xf32>
    %306 = tpu.reciprocal %305 {approx = true} : vector<1x16x1xf32> -> vector<1x16x1xf32>
    %307 = vector.broadcast %306 : vector<1x16x1xf32> to vector<8x16x1xf32>
    %308 = arith.mulf %303, %307 : vector<8x16x1xf32>
    %309 = vector.broadcast %308 : vector<8x16x1xf32> to vector<8x16x32xf32>
    %310 = arith.mulf %309, %293 : vector<8x16x32xf32>
    %cst_108 = arith.constant dense<0.000000e+00> : vector<16x32xf32>
    %311 = vector.multi_reduction <add>, %310, %cst_108 [0] : vector<8x16x32xf32> to vector<16x32xf32>
    %c0_109 = arith.constant 0 : index
    %c0_110 = arith.constant 0 : index
    %312 = vector.load %arg7[%c0_109, %c0_110] : memref<32x32xf32, #tpu.memory_space<vmem>>, vector<32x32xf32>
    %cst_111 = arith.constant dense<0.000000e+00> : vector<16x32xf32>
    %313 = tpu.matmul %311, %312, %cst_111 {dimension_numbers = #tpu.dot_dimension_numbers<[1], [0], [0], [1], [0, 0, 1, 1], [], []>} : vector<16x32xf32>, vector<32x32xf32>, vector<16x32xf32> -> vector<16x32xf32>
    %314 = vector.broadcast %5 : vector<1x32xf32> to vector<16x32xf32>
    %315 = arith.addf %313, %314 : vector<16x32xf32>
    %cst_112 = arith.constant 0.000000e+00 : f32
    %316 = vector.broadcast %cst_112 : f32 to vector<16x32xf32>
    %317 = arith.maximumf %315, %316 : vector<16x32xf32>
    %c0_113 = arith.constant 0 : index
    %c0_114 = arith.constant 0 : index
    %318 = vector.load %arg8[%c0_113, %c0_114] : memref<32x16xf32, #tpu.memory_space<vmem>>, vector<32x16xf32>
    %cst_115 = arith.constant dense<0.000000e+00> : vector<16x16xf32>
    %319 = tpu.matmul %317, %318, %cst_115 {dimension_numbers = #tpu.dot_dimension_numbers<[1], [0], [0], [1], [0, 0, 1, 1], [], []>} : vector<16x32xf32>, vector<32x16xf32>, vector<16x16xf32> -> vector<16x16xf32>
    %320 = vector.broadcast %6 : vector<1x16xf32> to vector<16x16xf32>
    %321 = arith.addf %319, %320 : vector<16x16xf32>
    %cst_116 = arith.constant 0.000000e+00 : f32
    %322 = vector.broadcast %cst_116 : f32 to vector<16x16xf32>
    %323 = arith.maximumf %321, %322 : vector<16x16xf32>
    %324 = tpu.transpose %323, [1, 0] : vector<16x16xf32> -> vector<16x16xf32>
    %cst_117 = arith.constant dense<0.000000e+00> : vector<1x16xf32>
    %325 = tpu.matmul %8, %324, %cst_117 {dimension_numbers = #tpu.dot_dimension_numbers<[1], [0], [0], [1], [0, 0, 1, 1], [], []>} : vector<1x16xf32>, vector<16x16xf32>, vector<1x16xf32> -> vector<1x16xf32>
    %326 = vector.broadcast %7 : vector<1x1xf32> to vector<1x16xf32>
    %327 = arith.addf %325, %326 : vector<1x16xf32>
    %328 = arith.negf %327 : vector<1x16xf32>
    %329 = math.exp %328 : vector<1x16xf32>
    %cst_118 = arith.constant 1.000000e+00 : f32
    %330 = vector.broadcast %cst_118 : f32 to vector<1x16xf32>
    %331 = arith.addf %330, %329 : vector<1x16xf32>
    %332 = arith.divf %330, %331 : vector<1x16xf32>
    %333 = vector.shape_cast %332 : vector<1x16xf32> to vector<1x1x16xf32>
    %c0_119 = arith.constant 0 : index
    %c0_120 = arith.constant 0 : index
    %c0_121 = arith.constant 0 : index
    %334 = vector.load %arg10[%c0_119, %c0_120, %c0_121] : memref<1x1x16xf32, #tpu.memory_space<vmem>>, vector<1x1x16xf32>
    tpu.vector_store %arg10[%c0_119, %c0_120, %c0_121], %333 {strides = array<i32>} : memref<1x1x16xf32, #tpu.memory_space<vmem>>, vector<1x1x16xf32>,
    return
  }
  func.func @transform_0(%arg0: i32) -> (i32, i32) {
    %c0_i32 = arith.constant 0 : i32
    %c0_i32_0 = arith.constant 0 : i32
    return %arg0, %c0_i32 : i32, i32
  }
  func.func @transform_1(%arg0: i32) -> (i32, i32) {
    %c0_i32 = arith.constant 0 : i32
    %c0_i32_0 = arith.constant 0 : i32
    return %arg0, %c0_i32 : i32, i32
  }
  func.func @transform_2(%arg0: i32) -> (i32, i32) {
    %c0_i32 = arith.constant 0 : i32
    %c0_i32_0 = arith.constant 0 : i32
    %c0_i32_1 = arith.constant 0 : i32
    return %c0_i32, %c0_i32_0 : i32, i32
  }
  func.func @transform_3(%arg0: i32) -> (i32, i32) {
    %c0_i32 = arith.constant 0 : i32
    %c0_i32_0 = arith.constant 0 : i32
    %c0_i32_1 = arith.constant 0 : i32
    return %c0_i32, %c0_i32_0 : i32, i32
  }
  func.func @transform_4(%arg0: i32) -> (i32, i32) {
    %c0_i32 = arith.constant 0 : i32
    %c0_i32_0 = arith.constant 0 : i32
    %c0_i32_1 = arith.constant 0 : i32
    return %c0_i32, %c0_i32_0 : i32, i32
  }
  func.func @transform_5(%arg0: i32) -> (i32, i32) {
    %c0_i32 = arith.constant 0 : i32
    %c0_i32_0 = arith.constant 0 : i32
    %c0_i32_1 = arith.constant 0 : i32
    return %c0_i32, %c0_i32_0 : i32, i32
  }
  func.func @transform_6(%arg0: i32) -> (i32, i32) {
    %c0_i32 = arith.constant 0 : i32
    %c0_i32_0 = arith.constant 0 : i32
    %c0_i32_1 = arith.constant 0 : i32
    return %c0_i32, %c0_i32_0 : i32, i32
  }
  func.func @transform_7(%arg0: i32) -> (i32, i32) {
    %c0_i32 = arith.constant 0 : i32
    %c0_i32_0 = arith.constant 0 : i32
    %c0_i32_1 = arith.constant 0 : i32
    return %c0_i32, %c0_i32_0 : i32, i32
  }
  func.func @transform_8(%arg0: i32) -> (i32, i32) {
    %c0_i32 = arith.constant 0 : i32
    %c0_i32_0 = arith.constant 0 : i32
    %c0_i32_1 = arith.constant 0 : i32
    return %c0_i32, %c0_i32_0 : i32, i32
  }
  func.func @transform_9(%arg0: i32) -> (i32, i32, i32) {
    %c0_i32 = arith.constant 0 : i32
    %c0_i32_0 = arith.constant 0 : i32
    %c0_i32_1 = arith.constant 0 : i32
    return %arg0, %c0_i32, %c0_i32_0 : i32, i32, i32
  }
}

</mosaic_0001>

<llo_original>
// kernel: tpu_custom_call.1
$region0: #{tpu_custom_call.1}
  #allocation0 [shape = 'u32[]', space=smem, size = 0x4, offset = 0x4, fixed_abs, tag = 'smem constant byte address 0x4 - core index']
  #allocation1 [shape = 'u32[144,128]{1,0:T(1,128)}', space=vmem, size = 0x12000, scoped, tag = 'internal scratch']
  #allocation2 [shape = 'bf16[128,32]{1,0:T(8,128)(2,1)}', space=vmem, size = 0x8000, scoped, tag = 'scratch operand']
  #allocation3 [shape = 'f32[128,128]{1,0:T(8,128)}', space=vmem, size = 0x10000, scoped, tag = 'scratch operand']
  #allocation4 [shape = 'f32[8,16,32]{2,1,0:T(8,128)}', space=vmem, size = 0x10000, scoped, tag = 'scratch operand']
  %s0 = inlined_call_operand.hbm [shape: f32[16,32], index: 0, kind: input, shape index: {}]
  %s1 = inlined_call_operand.vmem [shape: f32[16,8], index: 1, kind: input, shape index: {}]
  %s2 = inlined_call_operand.vmem [shape: f32[32,32], index: 2, kind: input, shape index: {}]
  %s3 = inlined_call_operand.vmem [shape: f32[32,32], index: 3, kind: input, shape index: {}]
  %s4 = inlined_call_operand.hbm [shape: bf16[32,128], index: 4, kind: input, shape index: {}]
  %s5 = inlined_call_operand.hbm [shape: bf16[32,128], index: 5, kind: input, shape index: {}]
  %s6 = inlined_call_operand.hbm [shape: f32[32,32], index: 6, kind: input, shape index: {}]
  %s7 = inlined_call_operand.vmem [shape: f32[32,16], index: 7, kind: input, shape index: {}]
  %s8 = inlined_call_operand.hbm [shape: f32[8,128], index: 8, kind: input, shape index: {}]
  %s9 = inlined_call_operand.hbm [shape: f32[1,1,16], index: 9, kind: output, shape index: {}]
  %s10 = sld [smem:[#allocation0]]
  $region66: #{tpu_custom_call.1} parent=0
    _
  %s12 = ssub.s32 1, %s10
  %s13 = scalar_select 0, %s12, %s10
  $region1: #{tpu_custom_call.1} parent=0
    #allocation5 [shape = 'u8[8192]{0}', space=vmem, size = 0x2000, scoped, tag = 'input window, operand 0, single buffered']
    #allocation6 [shape = 's32[1]{0}', space=sflag, size = 0x4, scoped, tag = 'scoped memory for tpu_custom_call.1']
    #allocation7 [shape = 's32[1]{0}', space=sflag, size = 0x4, scoped, tag = 'scoped memory for tpu_custom_call.1']
    #allocation8 [shape = 'u8[8192]{0}', space=vmem, size = 0x2000, scoped, tag = 'input window, operand 4, single buffered']
    #allocation9 [shape = 's32[1]{0}', space=sflag, size = 0x4, scoped, tag = 'scoped memory for tpu_custom_call.1']
    #allocation10 [shape = 'u8[8192]{0}', space=vmem, size = 0x2000, scoped, tag = 'input window, operand 5, single buffered']
    #allocation11 [shape = 'u8[16384]{0}', space=vmem, size = 0x4000, scoped, tag = 'input window, operand 6, single buffered']
    #allocation12 [shape = 's32[1]{0}', space=sflag, size = 0x4, scoped, tag = 'scoped memory for tpu_custom_call.1']
    #allocation13 [shape = 'u8[4096]{0}', space=vmem, size = 0x1000, scoped, tag = 'input window, operand 8, single buffered']
    #allocation14 [shape = 'u8[512]{0}', space=vmem, size = 0x400, scoped, tag = 'output window, operand 0, single buffered']
    %14 = vsyncpa [#allocation6], 0
    %15 = vsyncpa [#allocation9], 0
    %16 = vsyncpa [#allocation12], 0
    %17 = vsyncpa [#allocation7], 0
    // Predicated region
    $region2: #{tpu_custom_call.1} parent=1 // pred_check
      _
    $region3: #{tpu_custom_call.1} parent=1 // pred_check_branch
      %19 = sbr.rel (0) target = $region5
    $region4: #{tpu_custom_call.1} parent=1 // pred_region
      %s21 = ssub.s32 256, 256
      %22 = vsyncadd [#allocation6], %s21
      %s23 = sshll.u32 [#allocation5], 4
      %s24 = int_to_ptr.vmem [resolvable:$true] %s23
      %29 = dma.hbm_to_vmem [thread:$0]  %s0, 256, %s24, [#allocation6], 128, 128, 8
    $region5: #{tpu_custom_call.1} parent=1 // pred_fallthru
      _
    // Predicated region
    $region6: #{tpu_custom_call.1} parent=1 // pred_check
      _
    $region7: #{tpu_custom_call.1} parent=1 // pred_check_branch
      %31 = sbr.rel (0) target = $region9
    $region8: #{tpu_custom_call.1} parent=1 // pred_region
      _
    $region9: #{tpu_custom_call.1} parent=1 // pred_fallthru
      _
    // Predicated region
    $region10: #{tpu_custom_call.1} parent=1 // pred_check
      _
    $region11: #{tpu_custom_call.1} parent=1 // pred_check_branch
      %33 = sbr.rel (0) target = $region13
    $region12: #{tpu_custom_call.1} parent=1 // pred_region
      _
    $region13: #{tpu_custom_call.1} parent=1 // pred_fallthru
      _
    // Predicated region
    $region14: #{tpu_custom_call.1} parent=1 // pred_check
      _
    $region15: #{tpu_custom_call.1} parent=1 // pred_check_branch
      %35 = sbr.rel (0) target = $region17
    $region16: #{tpu_custom_call.1} parent=1 // pred_region
      _
    $region17: #{tpu_custom_call.1} parent=1 // pred_fallthru
      _
    // Predicated region
    $region18: #{tpu_custom_call.1} parent=1 // pred_check
      _
    $region19: #{tpu_custom_call.1} parent=1 // pred_check_branch
      %37 = sbr.rel (0) target = $region21
    $region20: #{tpu_custom_call.1} parent=1 // pred_region
      %s39 = ssub.s32 256, 256
      %40 = vsyncadd [#allocation9], %s39
      %s41 = sshll.u32 [#allocation8], 4
      %s42 = int_to_ptr.vmem [resolvable:$true] %s41
      %47 = dma.hbm_to_vmem [thread:$0]  %s4, 256, %s42, [#allocation9], 64, 64, 4
    $region21: #{tpu_custom_call.1} parent=1 // pred_fallthru
      _
    // Predicated region
    $region22: #{tpu_custom_call.1} parent=1 // pred_check
      _
    $region23: #{tpu_custom_call.1} parent=1 // pred_check_branch
      %49 = sbr.rel (0) target = $region25
    $region24: #{tpu_custom_call.1} parent=1 // pred_region
      %s51 = ssub.s32 256, 256
      %52 = vsyncadd [#allocation9], %s51
      %s53 = sshll.u32 [#allocation10], 4
      %s54 = int_to_ptr.vmem [resolvable:$true] %s53
      %59 = dma.hbm_to_vmem [thread:$0]  %s5, 256, %s54, [#allocation9], 64, 64, 4
    $region25: #{tpu_custom_call.1} parent=1 // pred_fallthru
      _
    // Predicated region
    $region26: #{tpu_custom_call.1} parent=1 // pred_check
      _
    $region27: #{tpu_custom_call.1} parent=1 // pred_check_branch
      %61 = sbr.rel (0) target = $region29
    $region28: #{tpu_custom_call.1} parent=1 // pred_region
      %s63 = ssub.s32 512, 512
      %64 = vsyncadd [#allocation12], %s63
      %s65 = sshll.u32 [#allocation11], 4
      %s66 = int_to_ptr.vmem [resolvable:$true] %s65
      %71 = dma.hbm_to_vmem [thread:$0]  %s6, 512, %s66, [#allocation12], 128, 128, 8
    $region29: #{tpu_custom_call.1} parent=1 // pred_fallthru
      _
    // Predicated region
    $region30: #{tpu_custom_call.1} parent=1 // pred_check
      _
    $region31: #{tpu_custom_call.1} parent=1 // pred_check_branch
      %73 = sbr.rel (0) target = $region33
    $region32: #{tpu_custom_call.1} parent=1 // pred_region
      _
    $region33: #{tpu_custom_call.1} parent=1 // pred_fallthru
      _
    // Predicated region
    $region34: #{tpu_custom_call.1} parent=1 // pred_check
      _
    $region35: #{tpu_custom_call.1} parent=1 // pred_check_branch
      %75 = sbr.rel (0) target = $region37
    $region36: #{tpu_custom_call.1} parent=1 // pred_region
      %s77 = ssub.s32 128, 128
      %78 = vsyncadd [#allocation12], %s77
      %s80 = sshll.u32 [#allocation13], 4
      %s81 = int_to_ptr.vmem [resolvable:$true] %s80
      %83 = dma.hbm_to_vmem [thread:$0]  %s8, 128, %s81, [#allocation12]
    $region37: #{tpu_custom_call.1} parent=1 // pred_fallthru
      _
    // Predicated region
    $region38: #{tpu_custom_call.1} parent=1 // pred_check
      _
    $region39: #{tpu_custom_call.1} parent=1 // pred_check_branch
      %85 = sbr.rel (0) target = $region41
    $region40: #{tpu_custom_call.1} parent=1 // pred_region
      %86 = dma.done [#allocation6], 256
    $region41: #{tpu_custom_call.1} parent=1 // pred_fallthru
      _
    // Predicated region
    $region42: #{tpu_custom_call.1} parent=1 // pred_check
      _
    $region43: #{tpu_custom_call.1} parent=1 // pred_check_branch
      %88 = sbr.rel (0) target = $region45
    $region44: #{tpu_custom_call.1} parent=1 // pred_region
      %89 = dma.done [#allocation9], 256
    $region45: #{tpu_custom_call.1} parent=1 // pred_fallthru
      _
    // Predicated region
    $region46: #{tpu_custom_call.1} parent=1 // pred_check
      _
    $region47: #{tpu_custom_call.1} parent=1 // pred_check_branch
      %91 = sbr.rel (0) target = $region49
    $region48: #{tpu_custom_call.1} parent=1 // pred_region
      %92 = dma.done [#allocation9], 256
    $region49: #{tpu_custom_call.1} parent=1 // pred_fallthru
      _
    // Predicated region
    $region50: #{tpu_custom_call.1} parent=1 // pred_check
      _
    $region51: #{tpu_custom_call.1} parent=1 // pred_check_branch
      %94 = sbr.rel (0) target = $region53
    $region52: #{tpu_custom_call.1} parent=1 // pred_region
      %95 = dma.done [#allocation12], 512
    $region53: #{tpu_custom_call.1} parent=1 // pred_fallthru
      _
    // Predicated region
    $region54: #{tpu_custom_call.1} parent=1 // pred_check
      _
    $region55: #{tpu_custom_call.1} parent=1 // pred_check_branch
      %97 = sbr.rel (0) target = $region57
    $region56: #{tpu_custom_call.1} parent=1 // pred_region
      %98 = dma.done [#allocation12], 128
    $region57: #{tpu_custom_call.1} parent=1 // pred_fallthru
      _
    %v100 = vld [vmem:[#allocation13] sm:$0xff]
    %v101 = vld [vmem:[#allocation5] sm:$0xff]
    %v102 = vld [vmem:[#allocation5 + $0x8] sm:$0xff]
    %v103 = vld [vmem:[%s1] sm:$0xff]
    %v104 = vld [vmem:[%s1 + $0x8] sm:$0xff]
    %v105 = vld [vmem:[%s2] sm:$0xff]
    %v106 = vld [vmem:[%s2 + $0x8] sm:$0xff]
    %v107 = vld [vmem:[%s2 + $0x10] sm:$0xff]
    %v108 = vld [vmem:[%s2 + $0x18] sm:$0xff]
    %v109 = vlaneseq
    %v110 = vshrl.u32 %v109, 7
    %v111 = vsub.s32 0, %v110
    %v112 = vrot.slane %v100, %v111
    %vm113 = vcmask 261120
    %v115 = vsel %vm113, %v101, 0
    %v118 = vsel %vm113, %v102, 0
    %120 = vmatprep.subr.mxu0 0.0
    %121 = vmatpush1.msra.mxu0 0.0
    %122 = vmatprep.subr.mxu0 0.0
    %123 = vmatpush1.msra.mxu0 0.0
    %124 = vmatprep.subr.mxu0 0.0
    %125 = vmatpush1.msra.mxu0 0.0
    %126 = vmatprep.subr.mxu0 0.0
    %127 = vmatpush1.msra.mxu0 0.0
    %128 = vmatprep.subr.mxu0 0.0
    %129 = vmatpush1.msra.mxu0 0.0
    %130 = vmatprep.subr.mxu0 0.0
    %131 = vmatpush1.msra.mxu0 0.0
    %132 = vmatprep.subr.mxu0 0.0
    %133 = vmatpush1.msra.mxu0 0.0
    %134 = vmatprep.subr.mxu0 0.0
    %135 = vmatpush1.msra.mxu0 0.0
    %136 = vmatprep.subr.mxu0 0.0
    %137 = vmatpush1.msra.mxu0 0.0
    %138 = vmatprep.subr.mxu0 0.0
    %139 = vmatpush1.msra.mxu0 0.0
    %140 = vmatprep.subr.mxu0 0.0
    %141 = vmatpush1.msra.mxu0 0.0
    %142 = vmatprep.subr.mxu0 0.0
    %143 = vmatpush1.msra.mxu0 0.0
    %144 = vmatprep.subr.mxu0 0.0
    %145 = vmatpush1.msra.mxu0 %v108
    %146 = vmatprep.subr.mxu0 0.0
    %147 = vmatpush1.msra.mxu0 %v107
    %148 = vmatprep.subr.mxu0 0.0
    %149 = vmatpush1.msra.mxu0 %v106
    %150 = vmatprep.subr.mxu0 0.0
    %151 = vmatpush1.msra.mxu0 %v105
    %152 = vmatprep.subr.mxu0 0.0
    %153 = vmatpush2.msra.mxu0 0.0
    %154 = vmatprep.subr.mxu0 0.0
    %155 = vmatpush2.msra.mxu0 0.0
    %156 = vmatprep.subr.mxu0 0.0
    %157 = vmatpush2.msra.mxu0 0.0
    %158 = vmatprep.subr.mxu0 0.0
    %159 = vmatpush2.msra.mxu0 0.0
    %160 = vmatprep.subr.mxu0 0.0
    %161 = vmatpush2.msra.mxu0 0.0
    %162 = vmatprep.subr.mxu0 0.0
    %163 = vmatpush2.msra.mxu0 0.0
    %164 = vmatprep.subr.mxu0 0.0
    %165 = vmatpush2.msra.mxu0 0.0
    %166 = vmatprep.subr.mxu0 0.0
    %167 = vmatpush2.msra.mxu0 0.0
    %168 = vmatprep.subr.mxu0 0.0
    %169 = vmatpush2.msra.mxu0 0.0
    %170 = vmatprep.subr.mxu0 0.0
    %171 = vmatpush2.msra.mxu0 0.0
    %172 = vmatprep.subr.mxu0 0.0
    %173 = vmatpush2.msra.mxu0 0.0
    %174 = vmatprep.subr.mxu0 0.0
    %175 = vmatpush2.msra.mxu0 0.0
    %176 = vmatprep.subr.mxu0 0.0
    %177 = vmatpush2.msra.mxu0 0.0
    %178 = vmatprep.subr.mxu0 0.0
    %179 = vmatpush2.msra.mxu0 0.0
    %180 = vmatprep.subr.mxu0 0.0
    %181 = vmatpush2.msra.mxu0 0.0
    %182 = vmatprep.subr.mxu0 0.0
    %183 = vmatpush2.msra.mxu0 0.0
    %184 = vmatprep.mubr.f32.mxu0 0.0
    %185 = vmatmul.mubr.f32.gmra.mxu0 %v115
    %v186 = vpop.f32.mrf.mxu0
    %v187 = vadd.f32 %v112, %v186
    %v188 = vpop.f32.mrf.mxu0
    %189 = vmatprep.mubr.f32.mxu0 0.0
    %190 = vmatmul.mubr.f32.gmra.mxu0 %v118
    %v191 = vpop.f32.mrf.mxu0
    %v192 = vadd.f32 %v112, %v191
    %v193 = vpop.f32.mrf.mxu0
    %194 = vdwg.mxu0
    %v195 = vmax.f32 %v187, 0.0
    %v196 = vmax.f32 %v192, 0.0
    %v197 = vld [vmem:[%s3] sm:$0xff]
    %v198 = vld [vmem:[%s3 + $0x8] sm:$0xff]
    %v199 = vld [vmem:[%s3 + $0x10] sm:$0xff]
    %v200 = vld [vmem:[%s3 + $0x18] sm:$0xff]
    %v201 = vlaneseq
    %v202 = vshrl.u32 %v201, 7
    %v203 = vsub.s32 1, %v202
    %v204 = vrot.slane %v100, %v203
    %v206 = vsel %vm113, %v195, 0
    %v209 = vsel %vm113, %v196, 0
    %211 = vmatprep.subr.mxu0 0.0
    %212 = vmatpush1.msra.mxu0 0.0
    %213 = vmatprep.subr.mxu0 0.0
    %214 = vmatpush1.msra.mxu0 0.0
    %215 = vmatprep.subr.mxu0 0.0
    %216 = vmatpush1.msra.mxu0 0.0
    %217 = vmatprep.subr.mxu0 0.0
    %218 = vmatpush1.msra.mxu0 0.0
    %219 = vmatprep.subr.mxu0 0.0
    %220 = vmatpush1.msra.mxu0 0.0
    %221 = vmatprep.subr.mxu0 0.0
    %222 = vmatpush1.msra.mxu0 0.0
    %223 = vmatprep.subr.mxu0 0.0
    %224 = vmatpush1.msra.mxu0 0.0
    %225 = vmatprep.subr.mxu0 0.0
    %226 = vmatpush1.msra.mxu0 0.0
    %227 = vmatprep.subr.mxu0 0.0
    %228 = vmatpush1.msra.mxu0 0.0
    %229 = vmatprep.subr.mxu0 0.0
    %230 = vmatpush1.msra.mxu0 0.0
    %231 = vmatprep.subr.mxu0 0.0
    %232 = vmatpush1.msra.mxu0 0.0
    %233 = vmatprep.subr.mxu0 0.0
    %234 = vmatpush1.msra.mxu0 0.0
    %235 = vmatprep.subr.mxu0 0.0
    %236 = vmatpush1.msra.mxu0 %v200
    %237 = vmatprep.subr.mxu0 0.0
    %238 = vmatpush1.msra.mxu0 %v199
    %239 = vmatprep.subr.mxu0 0.0
    %240 = vmatpush1.msra.mxu0 %v198
    %241 = vmatprep.subr.mxu0 0.0
    %242 = vmatpush1.msra.mxu0 %v197
    %243 = vmatprep.subr.mxu0 0.0
    %244 = vmatpush2.msra.mxu0 0.0
    %245 = vmatprep.subr.mxu0 0.0
    %246 = vmatpush2.msra.mxu0 0.0
    %247 = vmatprep.subr.mxu0 0.0
    %248 = vmatpush2.msra.mxu0 0.0
    %249 = vmatprep.subr.mxu0 0.0
    %250 = vmatpush2.msra.mxu0 0.0
    %251 = vmatprep.subr.mxu0 0.0
    %252 = vmatpush2.msra.mxu0 0.0
    %253 = vmatprep.subr.mxu0 0.0
    %254 = vmatpush2.msra.mxu0 0.0
    %255 = vmatprep.subr.mxu0 0.0
    %256 = vmatpush2.msra.mxu0 0.0
    %257 = vmatprep.subr.mxu0 0.0
    %258 = vmatpush2.msra.mxu0 0.0
    %259 = vmatprep.subr.mxu0 0.0
    %260 = vmatpush2.msra.mxu0 0.0
    %261 = vmatprep.subr.mxu0 0.0
    %262 = vmatpush2.msra.mxu0 0.0
    %263 = vmatprep.subr.mxu0 0.0
    %264 = vmatpush2.msra.mxu0 0.0
    %265 = vmatprep.subr.mxu0 0.0
    %266 = vmatpush2.msra.mxu0 0.0
    %267 = vmatprep.subr.mxu0 0.0
    %268 = vmatpush2.msra.mxu0 0.0
    %269 = vmatprep.subr.mxu0 0.0
    %270 = vmatpush2.msra.mxu0 0.0
    %271 = vmatprep.subr.mxu0 0.0
    %272 = vmatpush2.msra.mxu0 0.0
    %273 = vmatprep.subr.mxu0 0.0
    %274 = vmatpush2.msra.mxu0 0.0
    %275 = vmatprep.mubr.f32.mxu0 0.0
    %276 = vmatmul.mubr.f32.gmra.mxu0 %v206
    %v277 = vpop.f32.mrf.mxu0
    %v278 = vadd.f32 %v204, %v277
    %v279 = vpop.f32.mrf.mxu0
    %280 = vmatprep.mubr.f32.mxu0 0.0
    %281 = vmatmul.mubr.f32.gmra.mxu0 %v209
    %v282 = vpop.f32.mrf.mxu0
    %v283 = vadd.f32 %v204, %v282
    %v284 = vpop.f32.mrf.mxu0
    %285 = vdwg.mxu0
    %287 = vset.pattern.permute.xlu0 0
    %288 = vperm.xlu0 %287, %v103
    %v289 = vpop.permute.xlu0 %288
    %292 = vset.pattern.permute.xlu0 0
    %293 = vperm.xlu0 %292, %v104
    %v294 = vpop.permute.xlu0 %293
    %v296 = vlaneseq
    %v297 = vshrl.u32 %v296, 7
    %v298 = vsub.s32 2, %v297
    %v299 = vrot.slane %v100, %v298
    %v300 = vmul.f32 %v289, %v299
    %v301 = vmul.f32 %v294, %v299
    %v302 = vadd.f32 %v278, %v300
    %v303 = vadd.f32 %v283, %v301
    %v304 = vmax.f32 %v302, 0.0
    %v305 = vmax.f32 %v303, 0.0
    %v306 = vpack.c.bf16 %v305, %v304
    %v308 = vunpack.c.l.b16 %v306
    %v309 = vunpack.c.h.b16 %v306
    %v310 = vpack.c.b16 %v308, %v308
    %v311 = vpack.c.b16 %v309, %v309
    %vm314 = vcmask 257024
    %315 = vst.msk [vmem:[#allocation2] sm:$0xf] %vm314, %v310
    %316 = vst.msk [vmem:[#allocation2 + $0x4] sm:$0xf] %vm314, %v311
    %317 = vset.pattern.permute.xlu0 1
    %318 = vperm.xlu0 %317, %v103
    %v319 = vpop.permute.xlu0 %318
    %321 = vset.pattern.permute.xlu0 1
    %322 = vperm.xlu0 %321, %v104
    %v323 = vpop.permute.xlu0 %322
    %v325 = vmul.f32 %v319, %v299
    %v326 = vmul.f32 %v323, %v299
    %v327 = vadd.f32 %v278, %v325
    %v328 = vadd.f32 %v283, %v326
    %v329 = vmax.f32 %v327, 0.0
    %v330 = vmax.f32 %v328, 0.0
    %v331 = vpack.c.bf16 %v330, %v329
    %v333 = vunpack.c.l.b16 %v331
    %v334 = vunpack.c.h.b16 %v331
    %v335 = vpack.c.b16 %v333, %v333
    %v336 = vpack.c.b16 %v334, %v334
    %339 = vst.msk [vmem:[#allocation2 + $0x8] sm:$0xf] %vm314, %v335
    %340 = vst.msk [vmem:[#allocation2 + $0xc] sm:$0xf] %vm314, %v336
    %341 = vset.pattern.permute.xlu0 2
    %342 = vperm.xlu0 %341, %v103
    %v343 = vpop.permute.xlu0 %342
    %345 = vset.pattern.permute.xlu0 2
    %346 = vperm.xlu0 %345, %v104
    %v347 = vpop.permute.xlu0 %346
    %v349 = vmul.f32 %v343, %v299
    %v350 = vmul.f32 %v347, %v299
    %v351 = vadd.f32 %v278, %v349
    %v352 = vadd.f32 %v283, %v350
    %v353 = vmax.f32 %v351, 0.0
    %v354 = vmax.f32 %v352, 0.0
    %v355 = vpack.c.bf16 %v354, %v353
    %v357 = vunpack.c.l.b16 %v355
    %v358 = vunpack.c.h.b16 %v355
    %v359 = vpack.c.b16 %v357, %v357
    %v360 = vpack.c.b16 %v358, %v358
    %363 = vst.msk [vmem:[#allocation2 + $0x10] sm:$0xf] %vm314, %v359
    %364 = vst.msk [vmem:[#allocation2 + $0x14] sm:$0xf] %vm314, %v360
    %365 = vset.pattern.permute.xlu0 3
    %366 = vperm.xlu0 %365, %v103
    %v367 = vpop.permute.xlu0 %366
    %369 = vset.pattern.permute.xlu0 3
    %370 = vperm.xlu0 %369, %v104
    %v371 = vpop.permute.xlu0 %370
    %v373 = vmul.f32 %v367, %v299
    %v374 = vmul.f32 %v371, %v299
    %v375 = vadd.f32 %v278, %v373
    %v376 = vadd.f32 %v283, %v374
    %v377 = vmax.f32 %v375, 0.0
    %v378 = vmax.f32 %v376, 0.0
    %v379 = vpack.c.bf16 %v378, %v377
    %v381 = vunpack.c.l.b16 %v379
    %v382 = vunpack.c.h.b16 %v379
    %v383 = vpack.c.b16 %v381, %v381
    %v384 = vpack.c.b16 %v382, %v382
    %387 = vst.msk [vmem:[#allocation2 + $0x18] sm:$0xf] %vm314, %v383
    %388 = vst.msk [vmem:[#allocation2 + $0x1c] sm:$0xf] %vm314, %v384
    %389 = vset.pattern.permute.xlu0 4
    %390 = vperm.xlu0 %389, %v103
    %v391 = vpop.permute.xlu0 %390
    %393 = vset.pattern.permute.xlu0 4
    %394 = vperm.xlu0 %393, %v104
    %v395 = vpop.permute.xlu0 %394
    %v397 = vmul.f32 %v391, %v299
    %v398 = vmul.f32 %v395, %v299
    %v399 = vadd.f32 %v278, %v397
    %v400 = vadd.f32 %v283, %v398
    %v401 = vmax.f32 %v399, 0.0
    %v402 = vmax.f32 %v400, 0.0
    %v403 = vpack.c.bf16 %v402, %v401
    %v405 = vunpack.c.l.b16 %v403
    %v406 = vunpack.c.h.b16 %v403
    %v407 = vpack.c.b16 %v405, %v405
    %v408 = vpack.c.b16 %v406, %v406
    %411 = vst.msk [vmem:[#allocation2 + $0x20] sm:$0xf] %vm314, %v407
    %412 = vst.msk [vmem:[#allocation2 + $0x24] sm:$0xf] %vm314, %v408
    %413 = vset.pattern.permute.xlu0 5
    %414 = vperm.xlu0 %413, %v103
    %v415 = vpop.permute.xlu0 %414
    %417 = vset.pattern.permute.xlu0 5
    %418 = vperm.xlu0 %417, %v104
    %v419 = vpop.permute.xlu0 %418
    %v421 = vmul.f32 %v415, %v299
    %v422 = vmul.f32 %v419, %v299
    %v423 = vadd.f32 %v278, %v421
    %v424 = vadd.f32 %v283, %v422
    %v425 = vmax.f32 %v423, 0.0
    %v426 = vmax.f32 %v424, 0.0
    %v427 = vpack.c.bf16 %v426, %v425
    %v429 = vunpack.c.l.b16 %v427
    %v430 = vunpack.c.h.b16 %v427
    %v431 = vpack.c.b16 %v429, %v429
    %v432 = vpack.c.b16 %v430, %v430
    %435 = vst.msk [vmem:[#allocation2 + $0x28] sm:$0xf] %vm314, %v431
    %436 = vst.msk [vmem:[#allocation2 + $0x2c] sm:$0xf] %vm314, %v432
    %437 = vset.pattern.permute.xlu0 6
    %438 = vperm.xlu0 %437, %v103
    %v439 = vpop.permute.xlu0 %438
    %441 = vset.pattern.permute.xlu0 6
    %442 = vperm.xlu0 %441, %v104
    %v443 = vpop.permute.xlu0 %442
    %v445 = vmul.f32 %v439, %v299
    %v446 = vmul.f32 %v443, %v299
    %v447 = vadd.f32 %v278, %v445
    %v448 = vadd.f32 %v283, %v446
    %v449 = vmax.f32 %v447, 0.0
    %v450 = vmax.f32 %v448, 0.0
    %v451 = vpack.c.bf16 %v450, %v449
    %v453 = vunpack.c.l.b16 %v451
    %v454 = vunpack.c.h.b16 %v451
    %v455 = vpack.c.b16 %v453, %v453
    %v456 = vpack.c.b16 %v454, %v454
    %459 = vst.msk [vmem:[#allocation2 + $0x30] sm:$0xf] %vm314, %v455
    %460 = vst.msk [vmem:[#allocation2 + $0x34] sm:$0xf] %vm314, %v456
    %461 = vset.pattern.permute.xlu0 7
    %462 = vperm.xlu0 %461, %v103
    %v463 = vpop.permute.xlu0 %462
    %465 = vset.pattern.permute.xlu0 7
    %466 = vperm.xlu0 %465, %v104
    %v467 = vpop.permute.xlu0 %466
    %v469 = vmul.f32 %v463, %v299
    %v470 = vmul.f32 %v467, %v299
    %v471 = vadd.f32 %v278, %v469
    %v472 = vadd.f32 %v283, %v470
    %v473 = vmax.f32 %v471, 0.0
    %v474 = vmax.f32 %v472, 0.0
    %v475 = vpack.c.bf16 %v474, %v473
    %v477 = vunpack.c.l.b16 %v475
    %v478 = vunpack.c.h.b16 %v475
    %v479 = vpack.c.b16 %v477, %v477
    %v480 = vpack.c.b16 %v478, %v478
    %483 = vst.msk [vmem:[#allocation2 + $0x38] sm:$0xf] %vm314, %v479
    %484 = vst.msk [vmem:[#allocation2 + $0x3c] sm:$0xf] %vm314, %v480
    %v485 = vld [vmem:[#allocation2] sm:$0xf]
    %v486 = vld [vmem:[#allocation2 + $0x4] sm:$0xf]
    %v487 = vld [vmem:[#allocation2 + $0x8] sm:$0xf]
    %v488 = vld [vmem:[#allocation2 + $0xc] sm:$0xf]
    %v489 = vld [vmem:[#allocation2 + $0x10] sm:$0xf]
    %v490 = vld [vmem:[#allocation2 + $0x14] sm:$0xf]
    %v491 = vld [vmem:[#allocation2 + $0x18] sm:$0xf]
    %v492 = vld [vmem:[#allocation2 + $0x1c] sm:$0xf]
    %v493 = vld [vmem:[#allocation2 + $0x20] sm:$0xf]
    %v494 = vld [vmem:[#allocation2 + $0x24] sm:$0xf]
    %v495 = vld [vmem:[#allocation2 + $0x28] sm:$0xf]
    %v496 = vld [vmem:[#allocation2 + $0x2c] sm:$0xf]
    %v497 = vld [vmem:[#allocation2 + $0x30] sm:$0xf]
    %v498 = vld [vmem:[#allocation2 + $0x34] sm:$0xf]
    %v499 = vld [vmem:[#allocation2 + $0x38] sm:$0xf]
    %v500 = vld [vmem:[#allocation2 + $0x3c] sm:$0xf]
    %v501 = vld [vmem:[#allocation8] sm:$0xf]
    %v502 = vld [vmem:[#allocation8 + $0x4] sm:$0xf]
    %v503 = vld [vmem:[#allocation8 + $0x8] sm:$0xf]
    %v504 = vld [vmem:[#allocation8 + $0xc] sm:$0xf]
    %v505 = vlaneseq
    %v506 = vshrl.u32 %v505, 7
    %v507 = vsub.s32 3, %v506
    %v508 = vrot.slane %v100, %v507
    %v525 = vunpack.c.l.b16 %v485
    %v526 = vunpack.c.l.b16 %v486
    %v527 = vunpack.c.l.b16 %v487
    %v528 = vunpack.c.l.b16 %v488
    %v529 = vunpack.c.l.b16 %v489
    %v530 = vunpack.c.l.b16 %v490
    %v531 = vunpack.c.l.b16 %v491
    %v532 = vunpack.c.l.b16 %v492
    %v533 = vunpack.c.l.b16 %v493
    %v534 = vunpack.c.l.b16 %v494
    %v535 = vunpack.c.l.b16 %v495
    %v536 = vunpack.c.l.b16 %v496
    %v537 = vunpack.c.l.b16 %v497
    %v538 = vunpack.c.l.b16 %v498
    %v539 = vunpack.c.l.b16 %v499
    %v540 = vunpack.c.l.b16 %v500
    %v541 = vpack.c.b16 %v526, %v525
    %v542 = vpack.c.b16 %v528, %v527
    %v543 = vpack.c.b16 %v530, %v529
    %v544 = vpack.c.b16 %v532, %v531
    %v545 = vpack.c.b16 %v534, %v533
    %v546 = vpack.c.b16 %v536, %v535
    %v547 = vpack.c.b16 %v538, %v537
    %v548 = vpack.c.b16 %v540, %v539
    %v553 = vunpack.c.l.b16 %v501
    %v554 = vunpack.c.l.b16 %v502
    %v555 = vunpack.c.l.b16 %v503
    %v556 = vunpack.c.l.b16 %v504
    %v557 = vpack.c.b16 %v554, %v553
    %v558 = vpack.c.b16 %v556, %v555
    %v562 = vsel %vm113, %v541, 0
    %v565 = vsel %vm113, %v542, 0
    %v568 = vsel %vm113, %v543, 0
    %v571 = vsel %vm113, %v544, 0
    %v574 = vsel %vm113, %v545, 0
    %v577 = vsel %vm113, %v546, 0
    %v580 = vsel %vm113, %v547, 0
    %v583 = vsel %vm113, %v548, 0
    %585 = vmatprep.subr.bf16.mxu0 0
    %586 = vmatpush1.bf16.msra.mxu0 0
    %587 = vmatprep.subr.bf16.mxu0 0
    %588 = vmatpush1.bf16.msra.mxu0 0
    %589 = vmatprep.subr.bf16.mxu0 0
    %590 = vmatpush1.bf16.msra.mxu0 0
    %591 = vmatprep.subr.bf16.mxu0 0
    %592 = vmatpush1.bf16.msra.mxu0 0
    %593 = vmatprep.subr.bf16.mxu0 0
    %594 = vmatpush1.bf16.msra.mxu0 0
    %595 = vmatprep.subr.bf16.mxu0 0
    %596 = vmatpush1.bf16.msra.mxu0 0
    %597 = vmatprep.subr.bf16.mxu0 0
    %598 = vmatpush1.bf16.msra.mxu0 %v558
    %599 = vmatprep.subr.bf16.mxu0 0
    %600 = vmatpush1.bf16.msra.mxu0 %v557
    %601 = vmatprep.subr.bf16.mxu0 0
    %602 = vmatpush2.bf16.msra.mxu0 0
    %603 = vmatprep.subr.bf16.mxu0 0
    %604 = vmatpush2.bf16.msra.mxu0 0
    %605 = vmatprep.subr.bf16.mxu0 0
    %606 = vmatpush2.bf16.msra.mxu0 0
    %607 = vmatprep.subr.bf16.mxu0 0
    %608 = vmatpush2.bf16.msra.mxu0 0
    %609 = vmatprep.subr.bf16.mxu0 0
    %610 = vmatpush2.bf16.msra.mxu0 0
    %611 = vmatprep.subr.bf16.mxu0 0
    %612 = vmatpush2.bf16.msra.mxu0 0
    %613 = vmatprep.subr.bf16.mxu0 0
    %614 = vmatpush2.bf16.msra.mxu0 0
    %615 = vmatprep.subr.bf16.mxu0 0
    %616 = vmatpush2.bf16.msra.mxu0 0
    %617 = vmatprep.mubr.bf16.mxu0 0
    %618 = vmatmul.mubr.bf16.gmra.mxu0 %v562
    %v619 = vpop.f32.mrf.mxu0
    %v620 = vadd.f32 %v508, %v619
    %v621 = vpop.f32.mrf.mxu0
    %v622 = vpop.f32.mrf.mxu0
    %v623 = vadd.f32 %v508, %v622
    %v624 = vpop.f32.mrf.mxu0
    %625 = vmatprep.mubr.bf16.mxu0 0
    %626 = vmatmul.mubr.bf16.gmra.mxu0 %v565
    %v627 = vpop.f32.mrf.mxu0
    %v628 = vadd.f32 %v508, %v627
    %v629 = vpop.f32.mrf.mxu0
    %v630 = vpop.f32.mrf.mxu0
    %v631 = vadd.f32 %v508, %v630
    %v632 = vpop.f32.mrf.mxu0
    %633 = vmatprep.mubr.bf16.mxu0 0
    %634 = vmatmul.mubr.bf16.gmra.mxu0 %v568
    %v635 = vpop.f32.mrf.mxu0
    %v636 = vadd.f32 %v508, %v635
    %v637 = vpop.f32.mrf.mxu0
    %v638 = vpop.f32.mrf.mxu0
    %v639 = vadd.f32 %v508, %v638
    %v640 = vpop.f32.mrf.mxu0
    %641 = vmatprep.mubr.bf16.mxu0 0
    %642 = vmatmul.mubr.bf16.gmra.mxu0 %v571
    %v643 = vpop.f32.mrf.mxu0
    %v644 = vadd.f32 %v508, %v643
    %v645 = vpop.f32.mrf.mxu0
    %v646 = vpop.f32.mrf.mxu0
    %v647 = vadd.f32 %v508, %v646
    %v648 = vpop.f32.mrf.mxu0
    %649 = vmatprep.mubr.bf16.mxu0 0
    %650 = vmatmul.mubr.bf16.gmra.mxu0 %v574
    %v651 = vpop.f32.mrf.mxu0
    %v652 = vadd.f32 %v508, %v651
    %v653 = vpop.f32.mrf.mxu0
    %v654 = vpop.f32.mrf.mxu0
    %v655 = vadd.f32 %v508, %v654
    %v656 = vpop.f32.mrf.mxu0
    %657 = vmatprep.mubr.bf16.mxu0 0
    %658 = vmatmul.mubr.bf16.gmra.mxu0 %v577
    %v659 = vpop.f32.mrf.mxu0
    %v660 = vadd.f32 %v508, %v659
    %v661 = vpop.f32.mrf.mxu0
    %v662 = vpop.f32.mrf.mxu0
    %v663 = vadd.f32 %v508, %v662
    %v664 = vpop.f32.mrf.mxu0
    %665 = vmatprep.mubr.bf16.mxu0 0
    %666 = vmatmul.mubr.bf16.gmra.mxu0 %v580
    %v667 = vpop.f32.mrf.mxu0
    %v668 = vadd.f32 %v508, %v667
    %v669 = vpop.f32.mrf.mxu0
    %v670 = vpop.f32.mrf.mxu0
    %v671 = vadd.f32 %v508, %v670
    %v672 = vpop.f32.mrf.mxu0
    %673 = vmatprep.mubr.bf16.mxu0 0
    %674 = vmatmul.mubr.bf16.gmra.mxu0 %v583
    %v675 = vpop.f32.mrf.mxu0
    %v676 = vadd.f32 %v508, %v675
    %v677 = vpop.f32.mrf.mxu0
    %v678 = vpop.f32.mrf.mxu0
    %v679 = vadd.f32 %v508, %v678
    %v680 = vpop.f32.mrf.mxu0
    %681 = vdwg.mxu0
    %682 = vst [vmem:[#allocation3] sm:$0xff] %v620
    %683 = vst [vmem:[#allocation3 + $0x8] sm:$0xff] %v623
    %684 = vst [vmem:[#allocation3 + $0x10] sm:$0xff] %v628
    %685 = vst [vmem:[#allocation3 + $0x18] sm:$0xff] %v631
    %686 = vst [vmem:[#allocation3 + $0x20] sm:$0xff] %v636
    %687 = vst [vmem:[#allocation3 + $0x28] sm:$0xff] %v639
    %688 = vst [vmem:[#allocation3 + $0x30] sm:$0xff] %v644
    %689 = vst [vmem:[#allocation3 + $0x38] sm:$0xff] %v647
    %690 = vst [vmem:[#allocation3 + $0x40] sm:$0xff] %v652
    %691 = vst [vmem:[#allocation3 + $0x48] sm:$0xff] %v655
    %692 = vst [vmem:[#allocation3 + $0x50] sm:$0xff] %v660
    %693 = vst [vmem:[#allocation3 + $0x58] sm:$0xff] %v663
    %694 = vst [vmem:[#allocation3 + $0x60] sm:$0xff] %v668
    %695 = vst [vmem:[#allocation3 + $0x68] sm:$0xff] %v671
    %696 = vst [vmem:[#allocation3 + $0x70] sm:$0xff] %v676
    %697 = vst [vmem:[#allocation3 + $0x78] sm:$0xff] %v679
    %v698 = vld [vmem:[#allocation3] sm:$0xff]
    %v699 = vld [vmem:[#allocation3 + $0x8] sm:$0xff]
    %v700 = vld [vmem:[#allocation10] sm:$0xf]
    %v701 = vld [vmem:[#allocation10 + $0x4] sm:$0xf]
    %v702 = vld [vmem:[#allocation10 + $0x8] sm:$0xf]
    %v703 = vld [vmem:[#allocation10 + $0xc] sm:$0xf]
    %v708 = vunpack.c.l.b16 %v700
    %v709 = vunpack.c.l.b16 %v701
    %v710 = vunpack.c.l.b16 %v702
    %v711 = vunpack.c.l.b16 %v703
    %v712 = vpack.c.b16 %v709, %v708
    %v713 = vpack.c.b16 %v711, %v710
    %v717 = vsel %vm113, 0, 0
    %719 = vmatprep.subr.bf16.mxu0 0
    %720 = vmatpush1.bf16.msra.mxu0 0
    %721 = vmatprep.subr.bf16.mxu0 0
    %722 = vmatpush1.bf16.msra.mxu0 0
    %723 = vmatprep.subr.bf16.mxu0 0
    %724 = vmatpush1.bf16.msra.mxu0 0
    %725 = vmatprep.subr.bf16.mxu0 0
    %726 = vmatpush1.bf16.msra.mxu0 0
    %727 = vmatprep.subr.bf16.mxu0 0
    %728 = vmatpush1.bf16.msra.mxu0 0
    %729 = vmatprep.subr.bf16.mxu0 0
    %730 = vmatpush1.bf16.msra.mxu0 0
    %731 = vmatprep.subr.bf16.mxu0 0
    %732 = vmatpush1.bf16.msra.mxu0 %v713
    %733 = vmatprep.subr.bf16.mxu0 0
    %734 = vmatpush1.bf16.msra.mxu0 %v712
    %735 = vmatprep.subr.bf16.mxu0 0
    %736 = vmatpush2.bf16.msra.mxu0 0
    %737 = vmatprep.subr.bf16.mxu0 0
    %738 = vmatpush2.bf16.msra.mxu0 0
    %739 = vmatprep.subr.bf16.mxu0 0
    %740 = vmatpush2.bf16.msra.mxu0 0
    %741 = vmatprep.subr.bf16.mxu0 0
    %742 = vmatpush2.bf16.msra.mxu0 0
    %743 = vmatprep.subr.bf16.mxu0 0
    %744 = vmatpush2.bf16.msra.mxu0 0
    %745 = vmatprep.subr.bf16.mxu0 0
    %746 = vmatpush2.bf16.msra.mxu0 0
    %747 = vmatprep.subr.bf16.mxu0 0
    %748 = vmatpush2.bf16.msra.mxu0 0
    %749 = vmatprep.subr.bf16.mxu0 0
    %750 = vmatpush2.bf16.msra.mxu0 0
    %751 = vmatprep.mubr.bf16.mxu0 0
    %752 = vmatmul.mubr.bf16.gmra.mxu0 %v717
    %v753 = vpop.f32.mrf.mxu0
    %v754 = vadd.f32 0.0, %v753
    %v755 = vpop.f32.mrf.mxu0
    %v756 = vpop.f32.mrf.mxu0
    %v757 = vadd.f32 0.0, %v756
    %v758 = vpop.f32.mrf.mxu0
    %759 = vdwg.mxu0
    %v760 = vadd.f32 %v698, %v754
    %v761 = vadd.f32 %v699, %v757
    %v762 = vxor.u32 %v760, 2147483648
    %v763 = vxor.u32 %v761, 2147483648
    %v764 = vmul.f32 %v762, 1.442695
    %v765 = vpow.pop %v764
    %v766 = vmul.f32 %v763, 1.442695
    %v767 = vpow.pop %v766
    %v768 = vadd.f32 %v765, 1.0
    %v769 = vadd.f32 %v767, 1.0
    %v770 = vrcp.pop %v768
    %v771 = vmul.f32 1.0, %v770
    %v772 = vrcp.pop %v769
    %v773 = vmul.f32 1.0, %v772
    %v774 = vtanh.pop %v760
    %v775 = vtanh.pop %v761
    %v776 = vmul.f32 %v771, 0.0
    %v777 = vmul.f32 %v773, 0.0
    %780 = vrot.lane.b32.xlu0 %v774, 32
    %v781 = vpop.permute.xlu0 %780
    %782 = vrot.lane.b32.xlu0 %v775, 32
    %v783 = vpop.permute.xlu0 %782
    %v786 = vmul.f32 %v771, %v781
    %v787 = vmul.f32 %v773, %v783
    %790 = vrot.lane.b32.xlu0 %v786, 32
    %v791 = vpop.permute.xlu0 %790
    %792 = vrot.lane.b32.xlu0 %v787, 32
    %v793 = vpop.permute.xlu0 %792
    %v796 = vadd.f32 %v776, %v791
    %v797 = vadd.f32 %v777, %v793
    %v798 = vtanh.pop %v796
    %v799 = vtanh.pop %v797
    %802 = vrot.lane.b32.xlu0 %v798, 32
    %v803 = vpop.permute.xlu0 %802
    %804 = vrot.lane.b32.xlu0 %v799, 32
    %v805 = vpop.permute.xlu0 %804
    %v808 = vmul.f32 %v771, %v803
    %v809 = vmul.f32 %v773, %v805
    %812 = vrot.lane.b32.xlu0 %v808, 64
    %v813 = vpop.permute.xlu0 %812
    %814 = vrot.lane.b32.xlu0 %v809, 64
    %v815 = vpop.permute.xlu0 %814
    %818 = vst.msk [vmem:[#allocation4] sm:$0xff] %vm113, %v813
    %819 = vst.msk [vmem:[#allocation4 + $0x8] sm:$0xff] %vm113, %v815
    %v820 = vld [vmem:[#allocation3 + $0x10] sm:$0xff]
    %v821 = vld [vmem:[#allocation3 + $0x18] sm:$0xff]
    %v822 = vpack.c.bf16 %v809, %v808
    %v823 = vld [vmem:[#allocation10] sm:$0xf]
    %v824 = vld [vmem:[#allocation10 + $0x4] sm:$0xf]
    %v825 = vld [vmem:[#allocation10 + $0x8] sm:$0xf]
    %v826 = vld [vmem:[#allocation10 + $0xc] sm:$0xf]
    %828 = vrot.lane.b32.xlu0 %v822, 64
    %v829 = vpop.permute.xlu0 %828
    %v834 = vunpack.c.l.b16 %v823
    %v835 = vunpack.c.l.b16 %v824
    %v836 = vunpack.c.l.b16 %v825
    %v837 = vunpack.c.l.b16 %v826
    %v838 = vpack.c.b16 %v835, %v834
    %v839 = vpack.c.b16 %v837, %v836
    %v843 = vsel %vm113, %v829, 0
    %845 = vmatprep.subr.bf16.mxu0 0
    %846 = vmatpush1.bf16.msra.mxu0 0
    %847 = vmatprep.subr.bf16.mxu0 0
    %848 = vmatpush1.bf16.msra.mxu0 0
    %849 = vmatprep.subr.bf16.mxu0 0
    %850 = vmatpush1.bf16.msra.mxu0 0
    %851 = vmatprep.subr.bf16.mxu0 0
    %852 = vmatpush1.bf16.msra.mxu0 0
    %853 = vmatprep.subr.bf16.mxu0 0
    %854 = vmatpush1.bf16.msra.mxu0 0
    %855 = vmatprep.subr.bf16.mxu0 0
    %856 = vmatpush1.bf16.msra.mxu0 0
    %857 = vmatprep.subr.bf16.mxu0 0
    %858 = vmatpush1.bf16.msra.mxu0 %v839
    %859 = vmatprep.subr.bf16.mxu0 0
    %860 = vmatpush1.bf16.msra.mxu0 %v838
    %861 = vmatprep.subr.bf16.mxu0 0
    %862 = vmatpush2.bf16.msra.mxu0 0
    %863 = vmatprep.subr.bf16.mxu0 0
    %864 = vmatpush2.bf16.msra.mxu0 0
    %865 = vmatprep.subr.bf16.mxu0 0
    %866 = vmatpush2.bf16.msra.mxu0 0
    %867 = vmatprep.subr.bf16.mxu0 0
    %868 = vmatpush2.bf16.msra.mxu0 0
    %869 = vmatprep.subr.bf16.mxu0 0
    %870 = vmatpush2.bf16.msra.mxu0 0
    %871 = vmatprep.subr.bf16.mxu0 0
    %872 = vmatpush2.bf16.msra.mxu0 0
    %873 = vmatprep.subr.bf16.mxu0 0
    %874 = vmatpush2.bf16.msra.mxu0 0
    %875 = vmatprep.subr.bf16.mxu0 0
    %876 = vmatpush2.bf16.msra.mxu0 0
    %877 = vmatprep.mubr.bf16.mxu0 0
    %878 = vmatmul.mubr.bf16.gmra.mxu0 %v843
    %v879 = vpop.f32.mrf.mxu0
    %v880 = vadd.f32 0.0, %v879
    %v881 = vpop.f32.mrf.mxu0
    %v882 = vpop.f32.mrf.mxu0
    %v883 = vadd.f32 0.0, %v882
    %v884 = vpop.f32.mrf.mxu0
    %885 = vdwg.mxu0
    %v886 = vadd.f32 %v820, %v880
    %v887 = vadd.f32 %v821, %v883
    %v888 = vxor.u32 %v886, 2147483648
    %v889 = vxor.u32 %v887, 2147483648
    %v890 = vmul.f32 %v888, 1.442695
    %v891 = vpow.pop %v890
    %v892 = vmul.f32 %v889, 1.442695
    %v893 = vpow.pop %v892
    %v894 = vadd.f32 %v891, 1.0
    %v895 = vadd.f32 %v893, 1.0
    %v896 = vrcp.pop %v894
    %v897 = vmul.f32 1.0, %v896
    %v898 = vrcp.pop %v895
    %v899 = vmul.f32 1.0, %v898
    %v900 = vtanh.pop %v886
    %v901 = vtanh.pop %v887
    %v902 = vmul.f32 %v897, %v796
    %v903 = vmul.f32 %v899, %v797
    %906 = vrot.lane.b32.xlu0 %v900, 32
    %v907 = vpop.permute.xlu0 %906
    %908 = vrot.lane.b32.xlu0 %v901, 32
    %v909 = vpop.permute.xlu0 %908
    %v912 = vmul.f32 %v897, %v907
    %v913 = vmul.f32 %v899, %v909
    %916 = vrot.lane.b32.xlu0 %v912, 32
    %v917 = vpop.permute.xlu0 %916
    %918 = vrot.lane.b32.xlu0 %v913, 32
    %v919 = vpop.permute.xlu0 %918
    %v922 = vadd.f32 %v902, %v917
    %v923 = vadd.f32 %v903, %v919
    %v924 = vtanh.pop %v922
    %v925 = vtanh.pop %v923
    %928 = vrot.lane.b32.xlu0 %v924, 32
    %v929 = vpop.permute.xlu0 %928
    %930 = vrot.lane.b32.xlu0 %v925, 32
    %v931 = vpop.permute.xlu0 %930
    %v934 = vmul.f32 %v897, %v929
    %v935 = vmul.f32 %v899, %v931
    %938 = vrot.lane.b32.xlu0 %v934, 64
    %v939 = vpop.permute.xlu0 %938
    %940 = vrot.lane.b32.xlu0 %v935, 64
    %v941 = vpop.permute.xlu0 %940
    %s944 = scalar_lea.vmem [#allocation4], 16
    %945 = vst.msk [vmem:[%s944] sm:$0xff] %vm113, %v939
    %946 = vst.msk [vmem:[%s944 + $0x8] sm:$0xff] %vm113, %v941
    %v947 = vld [vmem:[#allocation3 + $0x20] sm:$0xff]
    %v948 = vld [vmem:[#allocation3 + $0x28] sm:$0xff]
    %v949 = vpack.c.bf16 %v935, %v934
    %v950 = vld [vmem:[#allocation10] sm:$0xf]
    %v951 = vld [vmem:[#allocation10 + $0x4] sm:$0xf]
    %v952 = vld [vmem:[#allocation10 + $0x8] sm:$0xf]
    %v953 = vld [vmem:[#allocation10 + $0xc] sm:$0xf]
    %955 = vrot.lane.b32.xlu0 %v949, 64
    %v956 = vpop.permute.xlu0 %955
    %v961 = vunpack.c.l.b16 %v950
    %v962 = vunpack.c.l.b16 %v951
    %v963 = vunpack.c.l.b16 %v952
    %v964 = vunpack.c.l.b16 %v953
    %v965 = vpack.c.b16 %v962, %v961
    %v966 = vpack.c.b16 %v964, %v963
    %v970 = vsel %vm113, %v956, 0
    %972 = vmatprep.subr.bf16.mxu0 0
    %973 = vmatpush1.bf16.msra.mxu0 0
    %974 = vmatprep.subr.bf16.mxu0 0
    %975 = vmatpush1.bf16.msra.mxu0 0
    %976 = vmatprep.subr.bf16.mxu0 0
    %977 = vmatpush1.bf16.msra.mxu0 0
    %978 = vmatprep.subr.bf16.mxu0 0
    %979 = vmatpush1.bf16.msra.mxu0 0
    %980 = vmatprep.subr.bf16.mxu0 0
    %981 = vmatpush1.bf16.msra.mxu0 0
    %982 = vmatprep.subr.bf16.mxu0 0
    %983 = vmatpush1.bf16.msra.mxu0 0
    %984 = vmatprep.subr.bf16.mxu0 0
    %985 = vmatpush1.bf16.msra.mxu0 %v966
    %986 = vmatprep.subr.bf16.mxu0 0
    %987 = vmatpush1.bf16.msra.mxu0 %v965
    %988 = vmatprep.subr.bf16.mxu0 0
    %989 = vmatpush2.bf16.msra.mxu0 0
    %990 = vmatprep.subr.bf16.mxu0 0
    %991 = vmatpush2.bf16.msra.mxu0 0
    %992 = vmatprep.subr.bf16.mxu0 0
    %993 = vmatpush2.bf16.msra.mxu0 0
    %994 = vmatprep.subr.bf16.mxu0 0
    %995 = vmatpush2.bf16.msra.mxu0 0
    %996 = vmatprep.subr.bf16.mxu0 0
    %997 = vmatpush2.bf16.msra.mxu0 0
    %998 = vmatprep.subr.bf16.mxu0 0
    %999 = vmatpush2.bf16.msra.mxu0 0
    %1000 = vmatprep.subr.bf16.mxu0 0
    %1001 = vmatpush2.bf16.msra.mxu0 0
    %1002 = vmatprep.subr.bf16.mxu0 0
    %1003 = vmatpush2.bf16.msra.mxu0 0
    %1004 = vmatprep.mubr.bf16.mxu0 0
    %1005 = vmatmul.mubr.bf16.gmra.mxu0 %v970
    %v1006 = vpop.f32.mrf.mxu0
    %v1007 = vadd.f32 0.0, %v1006
    %v1008 = vpop.f32.mrf.mxu0
    %v1009 = vpop.f32.mrf.mxu0
    %v1010 = vadd.f32 0.0, %v1009
    %v1011 = vpop.f32.mrf.mxu0
    %1012 = vdwg.mxu0
    %v1013 = vadd.f32 %v947, %v1007
    %v1014 = vadd.f32 %v948, %v1010
    %v1015 = vxor.u32 %v1013, 2147483648
    %v1016 = vxor.u32 %v1014, 2147483648
    %v1017 = vmul.f32 %v1015, 1.442695
    %v1018 = vpow.pop %v1017
    %v1019 = vmul.f32 %v1016, 1.442695
    %v1020 = vpow.pop %v1019
    %v1021 = vadd.f32 %v1018, 1.0
    %v1022 = vadd.f32 %v1020, 1.0
    %v1023 = vrcp.pop %v1021
    %v1024 = vmul.f32 1.0, %v1023
    %v1025 = vrcp.pop %v1022
    %v1026 = vmul.f32 1.0, %v1025
    %v1027 = vtanh.pop %v1013
    %v1028 = vtanh.pop %v1014
    %v1029 = vmul.f32 %v1024, %v922
    %v1030 = vmul.f32 %v1026, %v923
    %1033 = vrot.lane.b32.xlu0 %v1027, 32
    %v1034 = vpop.permute.xlu0 %1033
    %1035 = vrot.lane.b32.xlu0 %v1028, 32
    %v1036 = vpop.permute.xlu0 %1035
    %v1039 = vmul.f32 %v1024, %v1034
    %v1040 = vmul.f32 %v1026, %v1036
    %1043 = vrot.lane.b32.xlu0 %v1039, 32
    %v1044 = vpop.permute.xlu0 %1043
    %1045 = vrot.lane.b32.xlu0 %v1040, 32
    %v1046 = vpop.permute.xlu0 %1045
    %v1049 = vadd.f32 %v1029, %v1044
    %v1050 = vadd.f32 %v1030, %v1046
    %v1051 = vtanh.pop %v1049
    %v1052 = vtanh.pop %v1050
    %1055 = vrot.lane.b32.xlu0 %v1051, 32
    %v1056 = vpop.permute.xlu0 %1055
    %1057 = vrot.lane.b32.xlu0 %v1052, 32
    %v1058 = vpop.permute.xlu0 %1057
    %v1061 = vmul.f32 %v1024, %v1056
    %v1062 = vmul.f32 %v1026, %v1058
    %1065 = vrot.lane.b32.xlu0 %v1061, 64
    %v1066 = vpop.permute.xlu0 %1065
    %1067 = vrot.lane.b32.xlu0 %v1062, 64
    %v1068 = vpop.permute.xlu0 %1067
    %s1071 = scalar_lea.vmem [#allocation4], 32
    %1072 = vst.msk [vmem:[%s1071] sm:$0xff] %vm113, %v1066
    %1073 = vst.msk [vmem:[%s1071 + $0x8] sm:$0xff] %vm113, %v1068
    %v1074 = vld [vmem:[#allocation3 + $0x30] sm:$0xff]
    %v1075 = vld [vmem:[#allocation3 + $0x38] sm:$0xff]
    %v1076 = vpack.c.bf16 %v1062, %v1061
    %v1077 = vld [vmem:[#allocation10] sm:$0xf]
    %v1078 = vld [vmem:[#allocation10 + $0x4] sm:$0xf]
    %v1079 = vld [vmem:[#allocation10 + $0x8] sm:$0xf]
    %v1080 = vld [vmem:[#allocation10 + $0xc] sm:$0xf]
    %1082 = vrot.lane.b32.xlu0 %v1076, 64
    %v1083 = vpop.permute.xlu0 %1082
    %v1088 = vunpack.c.l.b16 %v1077
    %v1089 = vunpack.c.l.b16 %v1078
    %v1090 = vunpack.c.l.b16 %v1079
    %v1091 = vunpack.c.l.b16 %v1080
    %v1092 = vpack.c.b16 %v1089, %v1088
    %v1093 = vpack.c.b16 %v1091, %v1090
    %v1097 = vsel %vm113, %v1083, 0
    %1099 = vmatprep.subr.bf16.mxu0 0
    %1100 = vmatpush1.bf16.msra.mxu0 0
    %1101 = vmatprep.subr.bf16.mxu0 0
    %1102 = vmatpush1.bf16.msra.mxu0 0
    %1103 = vmatprep.subr.bf16.mxu0 0
    %1104 = vmatpush1.bf16.msra.mxu0 0
    %1105 = vmatprep.subr.bf16.mxu0 0
    %1106 = vmatpush1.bf16.msra.mxu0 0
    %1107 = vmatprep.subr.bf16.mxu0 0
    %1108 = vmatpush1.bf16.msra.mxu0 0
    %1109 = vmatprep.subr.bf16.mxu0 0
    %1110 = vmatpush1.bf16.msra.mxu0 0
    %1111 = vmatprep.subr.bf16.mxu0 0
    %1112 = vmatpush1.bf16.msra.mxu0 %v1093
    %1113 = vmatprep.subr.bf16.mxu0 0
    %1114 = vmatpush1.bf16.msra.mxu0 %v1092
    %1115 = vmatprep.subr.bf16.mxu0 0
    %1116 = vmatpush2.bf16.msra.mxu0 0
    %1117 = vmatprep.subr.bf16.mxu0 0
    %1118 = vmatpush2.bf16.msra.mxu0 0
    %1119 = vmatprep.subr.bf16.mxu0 0
    %1120 = vmatpush2.bf16.msra.mxu0 0
    %1121 = vmatprep.subr.bf16.mxu0 0
    %1122 = vmatpush2.bf16.msra.mxu0 0
    %1123 = vmatprep.subr.bf16.mxu0 0
    %1124 = vmatpush2.bf16.msra.mxu0 0
    %1125 = vmatprep.subr.bf16.mxu0 0
    %1126 = vmatpush2.bf16.msra.mxu0 0
    %1127 = vmatprep.subr.bf16.mxu0 0
    %1128 = vmatpush2.bf16.msra.mxu0 0
    %1129 = vmatprep.subr.bf16.mxu0 0
    %1130 = vmatpush2.bf16.msra.mxu0 0
    %1131 = vmatprep.mubr.bf16.mxu0 0
    %1132 = vmatmul.mubr.bf16.gmra.mxu0 %v1097
    %v1133 = vpop.f32.mrf.mxu0
    %v1134 = vadd.f32 0.0, %v1133
    %v1135 = vpop.f32.mrf.mxu0
    %v1136 = vpop.f32.mrf.mxu0
    %v1137 = vadd.f32 0.0, %v1136
    %v1138 = vpop.f32.mrf.mxu0
    %1139 = vdwg.mxu0
    %v1140 = vadd.f32 %v1074, %v1134
    %v1141 = vadd.f32 %v1075, %v1137
    %v1142 = vxor.u32 %v1140, 2147483648
    %v1143 = vxor.u32 %v1141, 2147483648
    %v1144 = vmul.f32 %v1142, 1.442695
    %v1145 = vpow.pop %v1144
    %v1146 = vmul.f32 %v1143, 1.442695
    %v1147 = vpow.pop %v1146
    %v1148 = vadd.f32 %v1145, 1.0
    %v1149 = vadd.f32 %v1147, 1.0
    %v1150 = vrcp.pop %v1148
    %v1151 = vmul.f32 1.0, %v1150
    %v1152 = vrcp.pop %v1149
    %v1153 = vmul.f32 1.0, %v1152
    %v1154 = vtanh.pop %v1140
    %v1155 = vtanh.pop %v1141
    %v1156 = vmul.f32 %v1151, %v1049
    %v1157 = vmul.f32 %v1153, %v1050
    %1160 = vrot.lane.b32.xlu0 %v1154, 32
    %v1161 = vpop.permute.xlu0 %1160
    %1162 = vrot.lane.b32.xlu0 %v1155, 32
    %v1163 = vpop.permute.xlu0 %1162
    %v1166 = vmul.f32 %v1151, %v1161
    %v1167 = vmul.f32 %v1153, %v1163
    %1170 = vrot.lane.b32.xlu0 %v1166, 32
    %v1171 = vpop.permute.xlu0 %1170
    %1172 = vrot.lane.b32.xlu0 %v1167, 32
    %v1173 = vpop.permute.xlu0 %1172
    %v1176 = vadd.f32 %v1156, %v1171
    %v1177 = vadd.f32 %v1157, %v1173
    %v1178 = vtanh.pop %v1176
    %v1179 = vtanh.pop %v1177
    %1182 = vrot.lane.b32.xlu0 %v1178, 32
    %v1183 = vpop.permute.xlu0 %1182
    %1184 = vrot.lane.b32.xlu0 %v1179, 32
    %v1185 = vpop.permute.xlu0 %1184
    %v1188 = vmul.f32 %v1151, %v1183
    %v1189 = vmul.f32 %v1153, %v1185
    %1192 = vrot.lane.b32.xlu0 %v1188, 64
    %v1193 = vpop.permute.xlu0 %1192
    %1194 = vrot.lane.b32.xlu0 %v1189, 64
    %v1195 = vpop.permute.xlu0 %1194
    %s1198 = scalar_lea.vmem [#allocation4], 48
    %1199 = vst.msk [vmem:[%s1198] sm:$0xff] %vm113, %v1193
    %1200 = vst.msk [vmem:[%s1198 + $0x8] sm:$0xff] %vm113, %v1195
    %v1201 = vld [vmem:[#allocation3 + $0x40] sm:$0xff]
    %v1202 = vld [vmem:[#allocation3 + $0x48] sm:$0xff]
    %v1203 = vpack.c.bf16 %v1189, %v1188
    %v1204 = vld [vmem:[#allocation10] sm:$0xf]
    %v1205 = vld [vmem:[#allocation10 + $0x4] sm:$0xf]
    %v1206 = vld [vmem:[#allocation10 + $0x8] sm:$0xf]
    %v1207 = vld [vmem:[#allocation10 + $0xc] sm:$0xf]
    %1209 = vrot.lane.b32.xlu0 %v1203, 64
    %v1210 = vpop.permute.xlu0 %1209
    %v1215 = vunpack.c.l.b16 %v1204
    %v1216 = vunpack.c.l.b16 %v1205
    %v1217 = vunpack.c.l.b16 %v1206
    %v1218 = vunpack.c.l.b16 %v1207
    %v1219 = vpack.c.b16 %v1216, %v1215
    %v1220 = vpack.c.b16 %v1218, %v1217
    %v1224 = vsel %vm113, %v1210, 0
    %1226 = vmatprep.subr.bf16.mxu0 0
    %1227 = vmatpush1.bf16.msra.mxu0 0
    %1228 = vmatprep.subr.bf16.mxu0 0
    %1229 = vmatpush1.bf16.msra.mxu0 0
    %1230 = vmatprep.subr.bf16.mxu0 0
    %1231 = vmatpush1.bf16.msra.mxu0 0
    %1232 = vmatprep.subr.bf16.mxu0 0
    %1233 = vmatpush1.bf16.msra.mxu0 0
    %1234 = vmatprep.subr.bf16.mxu0 0
    %1235 = vmatpush1.bf16.msra.mxu0 0
    %1236 = vmatprep.subr.bf16.mxu0 0
    %1237 = vmatpush1.bf16.msra.mxu0 0
    %1238 = vmatprep.subr.bf16.mxu0 0
    %1239 = vmatpush1.bf16.msra.mxu0 %v1220
    %1240 = vmatprep.subr.bf16.mxu0 0
    %1241 = vmatpush1.bf16.msra.mxu0 %v1219
    %1242 = vmatprep.subr.bf16.mxu0 0
    %1243 = vmatpush2.bf16.msra.mxu0 0
    %1244 = vmatprep.subr.bf16.mxu0 0
    %1245 = vmatpush2.bf16.msra.mxu0 0
    %1246 = vmatprep.subr.bf16.mxu0 0
    %1247 = vmatpush2.bf16.msra.mxu0 0
    %1248 = vmatprep.subr.bf16.mxu0 0
    %1249 = vmatpush2.bf16.msra.mxu0 0
    %1250 = vmatprep.subr.bf16.mxu0 0
    %1251 = vmatpush2.bf16.msra.mxu0 0
    %1252 = vmatprep.subr.bf16.mxu0 0
    %1253 = vmatpush2.bf16.msra.mxu0 0
    %1254 = vmatprep.subr.bf16.mxu0 0
    %1255 = vmatpush2.bf16.msra.mxu0 0
    %1256 = vmatprep.subr.bf16.mxu0 0
    %1257 = vmatpush2.bf16.msra.mxu0 0
    %1258 = vmatprep.mubr.bf16.mxu0 0
    %1259 = vmatmul.mubr.bf16.gmra.mxu0 %v1224
    %v1260 = vpop.f32.mrf.mxu0
    %v1261 = vadd.f32 0.0, %v1260
    %v1262 = vpop.f32.mrf.mxu0
    %v1263 = vpop.f32.mrf.mxu0
    %v1264 = vadd.f32 0.0, %v1263
    %v1265 = vpop.f32.mrf.mxu0
    %1266 = vdwg.mxu0
    %v1267 = vadd.f32 %v1201, %v1261
    %v1268 = vadd.f32 %v1202, %v1264
    %v1269 = vxor.u32 %v1267, 2147483648
    %v1270 = vxor.u32 %v1268, 2147483648
    %v1271 = vmul.f32 %v1269, 1.442695
    %v1272 = vpow.pop %v1271
    %v1273 = vmul.f32 %v1270, 1.442695
    %v1274 = vpow.pop %v1273
    %v1275 = vadd.f32 %v1272, 1.0
    %v1276 = vadd.f32 %v1274, 1.0
    %v1277 = vrcp.pop %v1275
    %v1278 = vmul.f32 1.0, %v1277
    %v1279 = vrcp.pop %v1276
    %v1280 = vmul.f32 1.0, %v1279
    %v1281 = vtanh.pop %v1267
    %v1282 = vtanh.pop %v1268
    %v1283 = vmul.f32 %v1278, %v1176
    %v1284 = vmul.f32 %v1280, %v1177
    %1287 = vrot.lane.b32.xlu0 %v1281, 32
    %v1288 = vpop.permute.xlu0 %1287
    %1289 = vrot.lane.b32.xlu0 %v1282, 32
    %v1290 = vpop.permute.xlu0 %1289
    %v1293 = vmul.f32 %v1278, %v1288
    %v1294 = vmul.f32 %v1280, %v1290
    %1297 = vrot.lane.b32.xlu0 %v1293, 32
    %v1298 = vpop.permute.xlu0 %1297
    %1299 = vrot.lane.b32.xlu0 %v1294, 32
    %v1300 = vpop.permute.xlu0 %1299
    %v1303 = vadd.f32 %v1283, %v1298
    %v1304 = vadd.f32 %v1284, %v1300
    %v1305 = vtanh.pop %v1303
    %v1306 = vtanh.pop %v1304
    %1309 = vrot.lane.b32.xlu0 %v1305, 32
    %v1310 = vpop.permute.xlu0 %1309
    %1311 = vrot.lane.b32.xlu0 %v1306, 32
    %v1312 = vpop.permute.xlu0 %1311
    %v1315 = vmul.f32 %v1278, %v1310
    %v1316 = vmul.f32 %v1280, %v1312
    %1319 = vrot.lane.b32.xlu0 %v1315, 64
    %v1320 = vpop.permute.xlu0 %1319
    %1321 = vrot.lane.b32.xlu0 %v1316, 64
    %v1322 = vpop.permute.xlu0 %1321
    %s1325 = scalar_lea.vmem [#allocation4], 64
    %1326 = vst.msk [vmem:[%s1325] sm:$0xff] %vm113, %v1320
    %1327 = vst.msk [vmem:[%s1325 + $0x8] sm:$0xff] %vm113, %v1322
    %v1328 = vld [vmem:[#allocation3 + $0x50] sm:$0xff]
    %v1329 = vld [vmem:[#allocation3 + $0x58] sm:$0xff]
    %v1330 = vpack.c.bf16 %v1316, %v1315
    %v1331 = vld [vmem:[#allocation10] sm:$0xf]
    %v1332 = vld [vmem:[#allocation10 + $0x4] sm:$0xf]
    %v1333 = vld [vmem:[#allocation10 + $0x8] sm:$0xf]
    %v1334 = vld [vmem:[#allocation10 + $0xc] sm:$0xf]
    %1336 = vrot.lane.b32.xlu0 %v1330, 64
    %v1337 = vpop.permute.xlu0 %1336
    %v1342 = vunpack.c.l.b16 %v1331
    %v1343 = vunpack.c.l.b16 %v1332
    %v1344 = vunpack.c.l.b16 %v1333
    %v1345 = vunpack.c.l.b16 %v1334
    %v1346 = vpack.c.b16 %v1343, %v1342
    %v1347 = vpack.c.b16 %v1345, %v1344
    %v1351 = vsel %vm113, %v1337, 0
    %1353 = vmatprep.subr.bf16.mxu0 0
    %1354 = vmatpush1.bf16.msra.mxu0 0
    %1355 = vmatprep.subr.bf16.mxu0 0
    %1356 = vmatpush1.bf16.msra.mxu0 0
    %1357 = vmatprep.subr.bf16.mxu0 0
    %1358 = vmatpush1.bf16.msra.mxu0 0
    %1359 = vmatprep.subr.bf16.mxu0 0
    %1360 = vmatpush1.bf16.msra.mxu0 0
    %1361 = vmatprep.subr.bf16.mxu0 0
    %1362 = vmatpush1.bf16.msra.mxu0 0
    %1363 = vmatprep.subr.bf16.mxu0 0
    %1364 = vmatpush1.bf16.msra.mxu0 0
    %1365 = vmatprep.subr.bf16.mxu0 0
    %1366 = vmatpush1.bf16.msra.mxu0 %v1347
    %1367 = vmatprep.subr.bf16.mxu0 0
    %1368 = vmatpush1.bf16.msra.mxu0 %v1346
    %1369 = vmatprep.subr.bf16.mxu0 0
    %1370 = vmatpush2.bf16.msra.mxu0 0
    %1371 = vmatprep.subr.bf16.mxu0 0
    %1372 = vmatpush2.bf16.msra.mxu0 0
    %1373 = vmatprep.subr.bf16.mxu0 0
    %1374 = vmatpush2.bf16.msra.mxu0 0
    %1375 = vmatprep.subr.bf16.mxu0 0
    %1376 = vmatpush2.bf16.msra.mxu0 0
    %1377 = vmatprep.subr.bf16.mxu0 0
    %1378 = vmatpush2.bf16.msra.mxu0 0
    %1379 = vmatprep.subr.bf16.mxu0 0
    %1380 = vmatpush2.bf16.msra.mxu0 0
    %1381 = vmatprep.subr.bf16.mxu0 0
    %1382 = vmatpush2.bf16.msra.mxu0 0
    %1383 = vmatprep.subr.bf16.mxu0 0
    %1384 = vmatpush2.bf16.msra.mxu0 0
    %1385 = vmatprep.mubr.bf16.mxu0 0
    %1386 = vmatmul.mubr.bf16.gmra.mxu0 %v1351
    %v1387 = vpop.f32.mrf.mxu0
    %v1388 = vadd.f32 0.0, %v1387
    %v1389 = vpop.f32.mrf.mxu0
    %v1390 = vpop.f32.mrf.mxu0
    %v1391 = vadd.f32 0.0, %v1390
    %v1392 = vpop.f32.mrf.mxu0
    %1393 = vdwg.mxu0
    %v1394 = vadd.f32 %v1328, %v1388
    %v1395 = vadd.f32 %v1329, %v1391
    %v1396 = vxor.u32 %v1394, 2147483648
    %v1397 = vxor.u32 %v1395, 2147483648
    %v1398 = vmul.f32 %v1396, 1.442695
    %v1399 = vpow.pop %v1398
    %v1400 = vmul.f32 %v1397, 1.442695
    %v1401 = vpow.pop %v1400
    %v1402 = vadd.f32 %v1399, 1.0
    %v1403 = vadd.f32 %v1401, 1.0
    %v1404 = vrcp.pop %v1402
    %v1405 = vmul.f32 1.0, %v1404
    %v1406 = vrcp.pop %v1403
    %v1407 = vmul.f32 1.0, %v1406
    %v1408 = vtanh.pop %v1394
    %v1409 = vtanh.pop %v1395
    %v1410 = vmul.f32 %v1405, %v1303
    %v1411 = vmul.f32 %v1407, %v1304
    %1414 = vrot.lane.b32.xlu0 %v1408, 32
    %v1415 = vpop.permute.xlu0 %1414
    %1416 = vrot.lane.b32.xlu0 %v1409, 32
    %v1417 = vpop.permute.xlu0 %1416
    %v1420 = vmul.f32 %v1405, %v1415
    %v1421 = vmul.f32 %v1407, %v1417
    %1424 = vrot.lane.b32.xlu0 %v1420, 32
    %v1425 = vpop.permute.xlu0 %1424
    %1426 = vrot.lane.b32.xlu0 %v1421, 32
    %v1427 = vpop.permute.xlu0 %1426
    %v1430 = vadd.f32 %v1410, %v1425
    %v1431 = vadd.f32 %v1411, %v1427
    %v1432 = vtanh.pop %v1430
    %v1433 = vtanh.pop %v1431
    %1436 = vrot.lane.b32.xlu0 %v1432, 32
    %v1437 = vpop.permute.xlu0 %1436
    %1438 = vrot.lane.b32.xlu0 %v1433, 32
    %v1439 = vpop.permute.xlu0 %1438
    %v1442 = vmul.f32 %v1405, %v1437
    %v1443 = vmul.f32 %v1407, %v1439
    %1446 = vrot.lane.b32.xlu0 %v1442, 64
    %v1447 = vpop.permute.xlu0 %1446
    %1448 = vrot.lane.b32.xlu0 %v1443, 64
    %v1449 = vpop.permute.xlu0 %1448
    %s1452 = scalar_lea.vmem [#allocation4], 80
    %1453 = vst.msk [vmem:[%s1452] sm:$0xff] %vm113, %v1447
    %1454 = vst.msk [vmem:[%s1452 + $0x8] sm:$0xff] %vm113, %v1449
    %v1455 = vld [vmem:[#allocation3 + $0x60] sm:$0xff]
    %v1456 = vld [vmem:[#allocation3 + $0x68] sm:$0xff]
    %v1457 = vpack.c.bf16 %v1443, %v1442
    %v1458 = vld [vmem:[#allocation10] sm:$0xf]
    %v1459 = vld [vmem:[#allocation10 + $0x4] sm:$0xf]
    %v1460 = vld [vmem:[#allocation10 + $0x8] sm:$0xf]
    %v1461 = vld [vmem:[#allocation10 + $0xc] sm:$0xf]
    %1463 = vrot.lane.b32.xlu0 %v1457, 64
    %v1464 = vpop.permute.xlu0 %1463
    %v1469 = vunpack.c.l.b16 %v1458
    %v1470 = vunpack.c.l.b16 %v1459
    %v1471 = vunpack.c.l.b16 %v1460
    %v1472 = vunpack.c.l.b16 %v1461
    %v1473 = vpack.c.b16 %v1470, %v1469
    %v1474 = vpack.c.b16 %v1472, %v1471
    %v1478 = vsel %vm113, %v1464, 0
    %1480 = vmatprep.subr.bf16.mxu0 0
    %1481 = vmatpush1.bf16.msra.mxu0 0
    %1482 = vmatprep.subr.bf16.mxu0 0
    %1483 = vmatpush1.bf16.msra.mxu0 0
    %1484 = vmatprep.subr.bf16.mxu0 0
    %1485 = vmatpush1.bf16.msra.mxu0 0
    %1486 = vmatprep.subr.bf16.mxu0 0
    %1487 = vmatpush1.bf16.msra.mxu0 0
    %1488 = vmatprep.subr.bf16.mxu0 0
    %1489 = vmatpush1.bf16.msra.mxu0 0
    %1490 = vmatprep.subr.bf16.mxu0 0
    %1491 = vmatpush1.bf16.msra.mxu0 0
    %1492 = vmatprep.subr.bf16.mxu0 0
    %1493 = vmatpush1.bf16.msra.mxu0 %v1474
    %1494 = vmatprep.subr.bf16.mxu0 0
    %1495 = vmatpush1.bf16.msra.mxu0 %v1473
    %1496 = vmatprep.subr.bf16.mxu0 0
    %1497 = vmatpush2.bf16.msra.mxu0 0
    %1498 = vmatprep.subr.bf16.mxu0 0
    %1499 = vmatpush2.bf16.msra.mxu0 0
    %1500 = vmatprep.subr.bf16.mxu0 0
    %1501 = vmatpush2.bf16.msra.mxu0 0
    %1502 = vmatprep.subr.bf16.mxu0 0
    %1503 = vmatpush2.bf16.msra.mxu0 0
    %1504 = vmatprep.subr.bf16.mxu0 0
    %1505 = vmatpush2.bf16.msra.mxu0 0
    %1506 = vmatprep.subr.bf16.mxu0 0
    %1507 = vmatpush2.bf16.msra.mxu0 0
    %1508 = vmatprep.subr.bf16.mxu0 0
    %1509 = vmatpush2.bf16.msra.mxu0 0
    %1510 = vmatprep.subr.bf16.mxu0 0
    %1511 = vmatpush2.bf16.msra.mxu0 0
    %1512 = vmatprep.mubr.bf16.mxu0 0
    %1513 = vmatmul.mubr.bf16.gmra.mxu0 %v1478
    %v1514 = vpop.f32.mrf.mxu0
    %v1515 = vadd.f32 0.0, %v1514
    %v1516 = vpop.f32.mrf.mxu0
    %v1517 = vpop.f32.mrf.mxu0
    %v1518 = vadd.f32 0.0, %v1517
    %v1519 = vpop.f32.mrf.mxu0
    %1520 = vdwg.mxu0
    %v1521 = vadd.f32 %v1455, %v1515
    %v1522 = vadd.f32 %v1456, %v1518
    %v1523 = vxor.u32 %v1521, 2147483648
    %v1524 = vxor.u32 %v1522, 2147483648
    %v1525 = vmul.f32 %v1523, 1.442695
    %v1526 = vpow.pop %v1525
    %v1527 = vmul.f32 %v1524, 1.442695
    %v1528 = vpow.pop %v1527
    %v1529 = vadd.f32 %v1526, 1.0
    %v1530 = vadd.f32 %v1528, 1.0
    %v1531 = vrcp.pop %v1529
    %v1532 = vmul.f32 1.0, %v1531
    %v1533 = vrcp.pop %v1530
    %v1534 = vmul.f32 1.0, %v1533
    %v1535 = vtanh.pop %v1521
    %v1536 = vtanh.pop %v1522
    %v1537 = vmul.f32 %v1532, %v1430
    %v1538 = vmul.f32 %v1534, %v1431
    %1541 = vrot.lane.b32.xlu0 %v1535, 32
    %v1542 = vpop.permute.xlu0 %1541
    %1543 = vrot.lane.b32.xlu0 %v1536, 32
    %v1544 = vpop.permute.xlu0 %1543
    %v1547 = vmul.f32 %v1532, %v1542
    %v1548 = vmul.f32 %v1534, %v1544
    %1551 = vrot.lane.b32.xlu0 %v1547, 32
    %v1552 = vpop.permute.xlu0 %1551
    %1553 = vrot.lane.b32.xlu0 %v1548, 32
    %v1554 = vpop.permute.xlu0 %1553
    %v1557 = vadd.f32 %v1537, %v1552
    %v1558 = vadd.f32 %v1538, %v1554
    %v1559 = vtanh.pop %v1557
    %v1560 = vtanh.pop %v1558
    %1563 = vrot.lane.b32.xlu0 %v1559, 32
    %v1564 = vpop.permute.xlu0 %1563
    %1565 = vrot.lane.b32.xlu0 %v1560, 32
    %v1566 = vpop.permute.xlu0 %1565
    %v1569 = vmul.f32 %v1532, %v1564
    %v1570 = vmul.f32 %v1534, %v1566
    %1573 = vrot.lane.b32.xlu0 %v1569, 64
    %v1574 = vpop.permute.xlu0 %1573
    %1575 = vrot.lane.b32.xlu0 %v1570, 64
    %v1576 = vpop.permute.xlu0 %1575
    %s1579 = scalar_lea.vmem [#allocation4], 96
    %1580 = vst.msk [vmem:[%s1579] sm:$0xff] %vm113, %v1574
    %1581 = vst.msk [vmem:[%s1579 + $0x8] sm:$0xff] %vm113, %v1576
    %v1582 = vld [vmem:[#allocation3 + $0x70] sm:$0xff]
    %v1583 = vld [vmem:[#allocation3 + $0x78] sm:$0xff]
    %v1584 = vpack.c.bf16 %v1570, %v1569
    %v1585 = vld [vmem:[#allocation10] sm:$0xf]
    %v1586 = vld [vmem:[#allocation10 + $0x4] sm:$0xf]
    %v1587 = vld [vmem:[#allocation10 + $0x8] sm:$0xf]
    %v1588 = vld [vmem:[#allocation10 + $0xc] sm:$0xf]
    %1590 = vrot.lane.b32.xlu0 %v1584, 64
    %v1591 = vpop.permute.xlu0 %1590
    %v1596 = vunpack.c.l.b16 %v1585
    %v1597 = vunpack.c.l.b16 %v1586
    %v1598 = vunpack.c.l.b16 %v1587
    %v1599 = vunpack.c.l.b16 %v1588
    %v1600 = vpack.c.b16 %v1597, %v1596
    %v1601 = vpack.c.b16 %v1599, %v1598
    %v1605 = vsel %vm113, %v1591, 0
    %1607 = vmatprep.subr.bf16.mxu0 0
    %1608 = vmatpush1.bf16.msra.mxu0 0
    %1609 = vmatprep.subr.bf16.mxu0 0
    %1610 = vmatpush1.bf16.msra.mxu0 0
    %1611 = vmatprep.subr.bf16.mxu0 0
    %1612 = vmatpush1.bf16.msra.mxu0 0
    %1613 = vmatprep.subr.bf16.mxu0 0
    %1614 = vmatpush1.bf16.msra.mxu0 0
    %1615 = vmatprep.subr.bf16.mxu0 0
    %1616 = vmatpush1.bf16.msra.mxu0 0
    %1617 = vmatprep.subr.bf16.mxu0 0
    %1618 = vmatpush1.bf16.msra.mxu0 0
    %1619 = vmatprep.subr.bf16.mxu0 0
    %1620 = vmatpush1.bf16.msra.mxu0 %v1601
    %1621 = vmatprep.subr.bf16.mxu0 0
    %1622 = vmatpush1.bf16.msra.mxu0 %v1600
    %1623 = vmatprep.subr.bf16.mxu0 0
    %1624 = vmatpush2.bf16.msra.mxu0 0
    %1625 = vmatprep.subr.bf16.mxu0 0
    %1626 = vmatpush2.bf16.msra.mxu0 0
    %1627 = vmatprep.subr.bf16.mxu0 0
    %1628 = vmatpush2.bf16.msra.mxu0 0
    %1629 = vmatprep.subr.bf16.mxu0 0
    %1630 = vmatpush2.bf16.msra.mxu0 0
    %1631 = vmatprep.subr.bf16.mxu0 0
    %1632 = vmatpush2.bf16.msra.mxu0 0
    %1633 = vmatprep.subr.bf16.mxu0 0
    %1634 = vmatpush2.bf16.msra.mxu0 0
    %1635 = vmatprep.subr.bf16.mxu0 0
    %1636 = vmatpush2.bf16.msra.mxu0 0
    %1637 = vmatprep.subr.bf16.mxu0 0
    %1638 = vmatpush2.bf16.msra.mxu0 0
    %1639 = vmatprep.mubr.bf16.mxu0 0
    %1640 = vmatmul.mubr.bf16.gmra.mxu0 %v1605
    %v1641 = vpop.f32.mrf.mxu0
    %v1642 = vadd.f32 0.0, %v1641
    %v1643 = vpop.f32.mrf.mxu0
    %v1644 = vpop.f32.mrf.mxu0
    %v1645 = vadd.f32 0.0, %v1644
    %v1646 = vpop.f32.mrf.mxu0
    %1647 = vdwg.mxu0
    %v1648 = vadd.f32 %v1582, %v1642
    %v1649 = vadd.f32 %v1583, %v1645
    %v1650 = vxor.u32 %v1648, 2147483648
    %v1651 = vxor.u32 %v1649, 2147483648
    %v1652 = vmul.f32 %v1650, 1.442695
    %v1653 = vpow.pop %v1652
    %v1654 = vmul.f32 %v1651, 1.442695
    %v1655 = vpow.pop %v1654
    %v1656 = vadd.f32 %v1653, 1.0
    %v1657 = vadd.f32 %v1655, 1.0
    %v1658 = vrcp.pop %v1656
    %v1659 = vmul.f32 1.0, %v1658
    %v1660 = vrcp.pop %v1657
    %v1661 = vmul.f32 1.0, %v1660
    %v1662 = vtanh.pop %v1648
    %v1663 = vtanh.pop %v1649
    %v1664 = vmul.f32 %v1659, %v1557
    %v1665 = vmul.f32 %v1661, %v1558
    %1668 = vrot.lane.b32.xlu0 %v1662, 32
    %v1669 = vpop.permute.xlu0 %1668
    %1670 = vrot.lane.b32.xlu0 %v1663, 32
    %v1671 = vpop.permute.xlu0 %1670
    %v1674 = vmul.f32 %v1659, %v1669
    %v1675 = vmul.f32 %v1661, %v1671
    %1678 = vrot.lane.b32.xlu0 %v1674, 32
    %v1679 = vpop.permute.xlu0 %1678
    %1680 = vrot.lane.b32.xlu0 %v1675, 32
    %v1681 = vpop.permute.xlu0 %1680
    %v1684 = vadd.f32 %v1664, %v1679
    %v1685 = vadd.f32 %v1665, %v1681
    %v1686 = vtanh.pop %v1684
    %v1687 = vtanh.pop %v1685
    %1690 = vrot.lane.b32.xlu0 %v1686, 32
    %v1691 = vpop.permute.xlu0 %1690
    %1692 = vrot.lane.b32.xlu0 %v1687, 32
    %v1693 = vpop.permute.xlu0 %1692
    %v1696 = vmul.f32 %v1659, %v1691
    %v1697 = vmul.f32 %v1661, %v1693
    %1700 = vrot.lane.b32.xlu0 %v1696, 64
    %v1701 = vpop.permute.xlu0 %1700
    %1702 = vrot.lane.b32.xlu0 %v1697, 64
    %v1703 = vpop.permute.xlu0 %1702
    %s1706 = scalar_lea.vmem [#allocation4], 112
    %1707 = vst.msk [vmem:[%s1706] sm:$0xff] %vm113, %v1701
    %1708 = vst.msk [vmem:[%s1706 + $0x8] sm:$0xff] %vm113, %v1703
    %v1709 = vld [vmem:[#allocation4] sm:$0xff]
    %v1710 = vld [vmem:[#allocation4 + $0x8] sm:$0xff]
    %v1711 = vld [vmem:[#allocation4 + $0x10] sm:$0xff]
    %v1712 = vld [vmem:[#allocation4 + $0x18] sm:$0xff]
    %v1713 = vld [vmem:[#allocation4 + $0x20] sm:$0xff]
    %v1714 = vld [vmem:[#allocation4 + $0x28] sm:$0xff]
    %v1715 = vld [vmem:[#allocation4 + $0x30] sm:$0xff]
    %v1716 = vld [vmem:[#allocation4 + $0x38] sm:$0xff]
    %v1717 = vld [vmem:[#allocation4 + $0x40] sm:$0xff]
    %v1718 = vld [vmem:[#allocation4 + $0x48] sm:$0xff]
    %v1719 = vld [vmem:[#allocation4 + $0x50] sm:$0xff]
    %v1720 = vld [vmem:[#allocation4 + $0x58] sm:$0xff]
    %v1721 = vld [vmem:[#allocation4 + $0x60] sm:$0xff]
    %v1722 = vld [vmem:[#allocation4 + $0x68] sm:$0xff]
    %v1723 = vld [vmem:[#allocation4 + $0x70] sm:$0xff]
    %v1724 = vld [vmem:[#allocation4 + $0x78] sm:$0xff]
    %v1725 = vmul.f32 %v1709, %v1701
    %v1726 = vmul.f32 %v1710, %v1703
    %v1727 = vmul.f32 %v1711, %v1701
    %v1728 = vmul.f32 %v1712, %v1703
    %v1729 = vmul.f32 %v1713, %v1701
    %v1730 = vmul.f32 %v1714, %v1703
    %v1731 = vmul.f32 %v1715, %v1701
    %v1732 = vmul.f32 %v1716, %v1703
    %v1733 = vmul.f32 %v1717, %v1701
    %v1734 = vmul.f32 %v1718, %v1703
    %v1735 = vmul.f32 %v1719, %v1701
    %v1736 = vmul.f32 %v1720, %v1703
    %v1737 = vmul.f32 %v1721, %v1701
    %v1738 = vmul.f32 %v1722, %v1703
    %v1739 = vmul.f32 %v1723, %v1701
    %v1740 = vmul.f32 %v1724, %v1703
    %v1741 = vsel %vm113, %v1725, 0.0
    %1742 = vadd.xlane.f32.xlu0 %v1741
    %v1743 = vpop.xlane.xlu0 %1742
    %v1744 = vsel %vm113, %v1726, 0.0
    %1745 = vadd.xlane.f32.xlu0 %v1744
    %v1746 = vpop.xlane.xlu0 %1745
    %v1747 = vsel %vm113, %v1727, 0.0
    %1748 = vadd.xlane.f32.xlu0 %v1747
    %v1749 = vpop.xlane.xlu0 %1748
    %v1750 = vsel %vm113, %v1728, 0.0
    %1751 = vadd.xlane.f32.xlu0 %v1750
    %v1752 = vpop.xlane.xlu0 %1751
    %v1753 = vsel %vm113, %v1729, 0.0
    %1754 = vadd.xlane.f32.xlu0 %v1753
    %v1755 = vpop.xlane.xlu0 %1754
    %v1756 = vsel %vm113, %v1730, 0.0
    %1757 = vadd.xlane.f32.xlu0 %v1756
    %v1758 = vpop.xlane.xlu0 %1757
    %v1759 = vsel %vm113, %v1731, 0.0
    %1760 = vadd.xlane.f32.xlu0 %v1759
    %v1761 = vpop.xlane.xlu0 %1760
    %v1762 = vsel %vm113, %v1732, 0.0
    %1763 = vadd.xlane.f32.xlu0 %v1762
    %v1764 = vpop.xlane.xlu0 %1763
    %v1765 = vsel %vm113, %v1733, 0.0
    %1766 = vadd.xlane.f32.xlu0 %v1765
    %v1767 = vpop.xlane.xlu0 %1766
    %v1768 = vsel %vm113, %v1734, 0.0
    %1769 = vadd.xlane.f32.xlu0 %v1768
    %v1770 = vpop.xlane.xlu0 %1769
    %v1771 = vsel %vm113, %v1735, 0.0
    %1772 = vadd.xlane.f32.xlu0 %v1771
    %v1773 = vpop.xlane.xlu0 %1772
    %v1774 = vsel %vm113, %v1736, 0.0
    %1775 = vadd.xlane.f32.xlu0 %v1774
    %v1776 = vpop.xlane.xlu0 %1775
    %v1777 = vsel %vm113, %v1737, 0.0
    %1778 = vadd.xlane.f32.xlu0 %v1777
    %v1779 = vpop.xlane.xlu0 %1778
    %v1780 = vsel %vm113, %v1738, 0.0
    %1781 = vadd.xlane.f32.xlu0 %v1780
    %v1782 = vpop.xlane.xlu0 %1781
    %v1783 = vsel %vm113, %v1739, 0.0
    %1784 = vadd.xlane.f32.xlu0 %v1783
    %v1785 = vpop.xlane.xlu0 %1784
    %v1786 = vsel %vm113, %v1740, 0.0
    %1787 = vadd.xlane.f32.xlu0 %v1786
    %v1788 = vpop.xlane.xlu0 %1787
    %v1789 = vmax.f32 %v1743, %v1755
    %v1790 = vmax.f32 %v1749, %v1761
    %v1791 = vmax.f32 %v1789, %v1767
    %v1792 = vmax.f32 %v1790, %v1773
    %v1793 = vmax.f32 %v1791, %v1779
    %v1794 = vmax.f32 %v1792, %v1785
    %v1795 = vmax.f32 %v1793, %v1794
    %v1796 = vmax.f32 %v1746, %v1758
    %v1797 = vmax.f32 %v1752, %v1764
    %v1798 = vmax.f32 %v1796, %v1770
    %v1799 = vmax.f32 %v1797, %v1776
    %v1800 = vmax.f32 %v1798, %v1782
    %v1801 = vmax.f32 %v1799, %v1788
    %v1802 = vmax.f32 %v1800, %v1801
    %v1803 = vsub.f32 %v1743, %v1795
    %v1804 = vsub.f32 %v1746, %v1802
    %v1805 = vsub.f32 %v1749, %v1795
    %v1806 = vsub.f32 %v1752, %v1802
    %v1807 = vsub.f32 %v1755, %v1795
    %v1808 = vsub.f32 %v1758, %v1802
    %v1809 = vsub.f32 %v1761, %v1795
    %v1810 = vsub.f32 %v1764, %v1802
    %v1811 = vsub.f32 %v1767, %v1795
    %v1812 = vsub.f32 %v1770, %v1802
    %v1813 = vsub.f32 %v1773, %v1795
    %v1814 = vsub.f32 %v1776, %v1802
    %v1815 = vsub.f32 %v1779, %v1795
    %v1816 = vsub.f32 %v1782, %v1802
    %v1817 = vsub.f32 %v1785, %v1795
    %v1818 = vsub.f32 %v1788, %v1802
    %v1819 = vmul.f32 %v1803, 1.442695
    %v1820 = vpow.pop %v1819
    %v1821 = vmul.f32 %v1804, 1.442695
    %v1822 = vpow.pop %v1821
    %v1823 = vmul.f32 %v1805, 1.442695
    %v1824 = vpow.pop %v1823
    %v1825 = vmul.f32 %v1806, 1.442695
    %v1826 = vpow.pop %v1825
    %v1827 = vmul.f32 %v1807, 1.442695
    %v1828 = vpow.pop %v1827
    %v1829 = vmul.f32 %v1808, 1.442695
    %v1830 = vpow.pop %v1829
    %v1831 = vmul.f32 %v1809, 1.442695
    %v1832 = vpow.pop %v1831
    %v1833 = vmul.f32 %v1810, 1.442695
    %v1834 = vpow.pop %v1833
    %v1835 = vmul.f32 %v1811, 1.442695
    %v1836 = vpow.pop %v1835
    %v1837 = vmul.f32 %v1812, 1.442695
    %v1838 = vpow.pop %v1837
    %v1839 = vmul.f32 %v1813, 1.442695
    %v1840 = vpow.pop %v1839
    %v1841 = vmul.f32 %v1814, 1.442695
    %v1842 = vpow.pop %v1841
    %v1843 = vmul.f32 %v1815, 1.442695
    %v1844 = vpow.pop %v1843
    %v1845 = vmul.f32 %v1816, 1.442695
    %v1846 = vpow.pop %v1845
    %v1847 = vmul.f32 %v1817, 1.442695
    %v1848 = vpow.pop %v1847
    %v1849 = vmul.f32 %v1818, 1.442695
    %v1850 = vpow.pop %v1849
    %v1851 = vadd.f32 %v1820, %v1824
    %v1852 = vadd.f32 %v1851, %v1828
    %v1853 = vadd.f32 %v1852, %v1832
    %v1854 = vadd.f32 %v1853, %v1836
    %v1855 = vadd.f32 %v1854, %v1840
    %v1856 = vadd.f32 %v1855, %v1844
    %v1857 = vadd.f32 %v1856, %v1848
    %v1858 = vadd.f32 %v1822, %v1826
    %v1859 = vadd.f32 %v1858, %v1830
    %v1860 = vadd.f32 %v1859, %v1834
    %v1861 = vadd.f32 %v1860, %v1838
    %v1862 = vadd.f32 %v1861, %v1842
    %v1863 = vadd.f32 %v1862, %v1846
    %v1864 = vadd.f32 %v1863, %v1850
    %v1865 = vrcp.pop %v1857
    %v1866 = vrcp.pop %v1864
    %v1867 = vmul.f32 %v1820, %v1865
    %v1868 = vmul.f32 %v1822, %v1866
    %v1869 = vmul.f32 %v1824, %v1865
    %v1870 = vmul.f32 %v1826, %v1866
    %v1871 = vmul.f32 %v1828, %v1865
    %v1872 = vmul.f32 %v1830, %v1866
    %v1873 = vmul.f32 %v1832, %v1865
    %v1874 = vmul.f32 %v1834, %v1866
    %v1875 = vmul.f32 %v1836, %v1865
    %v1876 = vmul.f32 %v1838, %v1866
    %v1877 = vmul.f32 %v1840, %v1865
    %v1878 = vmul.f32 %v1842, %v1866
    %v1879 = vmul.f32 %v1844, %v1865
    %v1880 = vmul.f32 %v1846, %v1866
    %v1881 = vmul.f32 %v1848, %v1865
    %v1882 = vmul.f32 %v1850, %v1866
    %v1883 = vmul.f32 %v1867, %v1709
    %v1884 = vmul.f32 %v1868, %v1710
    %v1885 = vmul.f32 %v1869, %v1711
    %v1886 = vmul.f32 %v1870, %v1712
    %v1887 = vmul.f32 %v1871, %v1713
    %v1888 = vmul.f32 %v1872, %v1714
    %v1889 = vmul.f32 %v1873, %v1715
    %v1890 = vmul.f32 %v1874, %v1716
    %v1891 = vmul.f32 %v1875, %v1717
    %v1892 = vmul.f32 %v1876, %v1718
    %v1893 = vmul.f32 %v1877, %v1719
    %v1894 = vmul.f32 %v1878, %v1720
    %v1895 = vmul.f32 %v1879, %v1721
    %v1896 = vmul.f32 %v1880, %v1722
    %v1897 = vmul.f32 %v1881, %v1723
    %v1898 = vmul.f32 %v1882, %v1724
    %v1899 = vsel %vm113, %v1883, 0.0
    %v1900 = vsel %vm113, %v1885, 0.0
    %v1901 = vadd.f32 %v1899, %v1900
    %v1902 = vsel %vm113, %v1887, 0.0
    %v1903 = vadd.f32 %v1901, %v1902
    %v1904 = vsel %vm113, %v1889, 0.0
    %v1905 = vadd.f32 %v1903, %v1904
    %v1906 = vsel %vm113, %v1891, 0.0
    %v1907 = vadd.f32 %v1905, %v1906
    %v1908 = vsel %vm113, %v1893, 0.0
    %v1909 = vadd.f32 %v1907, %v1908
    %v1910 = vsel %vm113, %v1895, 0.0
    %v1911 = vadd.f32 %v1909, %v1910
    %v1912 = vsel %vm113, %v1897, 0.0
    %v1913 = vadd.f32 %v1911, %v1912
    %v1914 = vsel %vm113, %v1884, 0.0
    %v1915 = vsel %vm113, %v1886, 0.0
    %v1916 = vadd.f32 %v1914, %v1915
    %v1917 = vsel %vm113, %v1888, 0.0
    %v1918 = vadd.f32 %v1916, %v1917
    %v1919 = vsel %vm113, %v1890, 0.0
    %v1920 = vadd.f32 %v1918, %v1919
    %v1921 = vsel %vm113, %v1892, 0.0
    %v1922 = vadd.f32 %v1920, %v1921
    %v1923 = vsel %vm113, %v1894, 0.0
    %v1924 = vadd.f32 %v1922, %v1923
    %v1925 = vsel %vm113, %v1896, 0.0
    %v1926 = vadd.f32 %v1924, %v1925
    %v1927 = vsel %vm113, %v1898, 0.0
    %v1928 = vadd.f32 %v1926, %v1927
    %v1929 = vld [vmem:[#allocation11] sm:$0xff]
    %v1930 = vld [vmem:[#allocation11 + $0x8] sm:$0xff]
    %v1931 = vld [vmem:[#allocation11 + $0x10] sm:$0xff]
    %v1932 = vld [vmem:[#allocation11 + $0x18] sm:$0xff]
    %v1933 = vlaneseq
    %v1934 = vshrl.u32 %v1933, 7
    %v1935 = vsub.s32 4, %v1934
    %v1936 = vrot.slane %v100, %v1935
    %v1938 = vsel %vm113, %v1913, 0
    %v1941 = vsel %vm113, %v1928, 0
    %1943 = vmatprep.subr.mxu0 0.0
    %1944 = vmatpush1.msra.mxu0 0.0
    %1945 = vmatprep.subr.mxu0 0.0
    %1946 = vmatpush1.msra.mxu0 0.0
    %1947 = vmatprep.subr.mxu0 0.0
    %1948 = vmatpush1.msra.mxu0 0.0
    %1949 = vmatprep.subr.mxu0 0.0
    %1950 = vmatpush1.msra.mxu0 0.0
    %1951 = vmatprep.subr.mxu0 0.0
    %1952 = vmatpush1.msra.mxu0 0.0
    %1953 = vmatprep.subr.mxu0 0.0
    %1954 = vmatpush1.msra.mxu0 0.0
    %1955 = vmatprep.subr.mxu0 0.0
    %1956 = vmatpush1.msra.mxu0 0.0
    %1957 = vmatprep.subr.mxu0 0.0
    %1958 = vmatpush1.msra.mxu0 0.0
    %1959 = vmatprep.subr.mxu0 0.0
    %1960 = vmatpush1.msra.mxu0 0.0
    %1961 = vmatprep.subr.mxu0 0.0
    %1962 = vmatpush1.msra.mxu0 0.0
    %1963 = vmatprep.subr.mxu0 0.0
    %1964 = vmatpush1.msra.mxu0 0.0
    %1965 = vmatprep.subr.mxu0 0.0
    %1966 = vmatpush1.msra.mxu0 0.0
    %1967 = vmatprep.subr.mxu0 0.0
    %1968 = vmatpush1.msra.mxu0 %v1932
    %1969 = vmatprep.subr.mxu0 0.0
    %1970 = vmatpush1.msra.mxu0 %v1931
    %1971 = vmatprep.subr.mxu0 0.0
    %1972 = vmatpush1.msra.mxu0 %v1930
    %1973 = vmatprep.subr.mxu0 0.0
    %1974 = vmatpush1.msra.mxu0 %v1929
    %1975 = vmatprep.subr.mxu0 0.0
    %1976 = vmatpush2.msra.mxu0 0.0
    %1977 = vmatprep.subr.mxu0 0.0
    %1978 = vmatpush2.msra.mxu0 0.0
    %1979 = vmatprep.subr.mxu0 0.0
    %1980 = vmatpush2.msra.mxu0 0.0
    %1981 = vmatprep.subr.mxu0 0.0
    %1982 = vmatpush2.msra.mxu0 0.0
    %1983 = vmatprep.subr.mxu0 0.0
    %1984 = vmatpush2.msra.mxu0 0.0
    %1985 = vmatprep.subr.mxu0 0.0
    %1986 = vmatpush2.msra.mxu0 0.0
    %1987 = vmatprep.subr.mxu0 0.0
    %1988 = vmatpush2.msra.mxu0 0.0
    %1989 = vmatprep.subr.mxu0 0.0
    %1990 = vmatpush2.msra.mxu0 0.0
    %1991 = vmatprep.subr.mxu0 0.0
    %1992 = vmatpush2.msra.mxu0 0.0
    %1993 = vmatprep.subr.mxu0 0.0
    %1994 = vmatpush2.msra.mxu0 0.0
    %1995 = vmatprep.subr.mxu0 0.0
    %1996 = vmatpush2.msra.mxu0 0.0
    %1997 = vmatprep.subr.mxu0 0.0
    %1998 = vmatpush2.msra.mxu0 0.0
    %1999 = vmatprep.subr.mxu0 0.0
    %2000 = vmatpush2.msra.mxu0 0.0
    %2001 = vmatprep.subr.mxu0 0.0
    %2002 = vmatpush2.msra.mxu0 0.0
    %2003 = vmatprep.subr.mxu0 0.0
    %2004 = vmatpush2.msra.mxu0 0.0
    %2005 = vmatprep.subr.mxu0 0.0
    %2006 = vmatpush2.msra.mxu0 0.0
    %2007 = vmatprep.mubr.f32.mxu0 0.0
    %2008 = vmatmul.mubr.f32.gmra.mxu0 %v1938
    %v2009 = vpop.f32.mrf.mxu0
    %v2010 = vadd.f32 %v1936, %v2009
    %v2011 = vpop.f32.mrf.mxu0
    %2012 = vmatprep.mubr.f32.mxu0 0.0
    %2013 = vmatmul.mubr.f32.gmra.mxu0 %v1941
    %v2014 = vpop.f32.mrf.mxu0
    %v2015 = vadd.f32 %v1936, %v2014
    %v2016 = vpop.f32.mrf.mxu0
    %2017 = vdwg.mxu0
    %v2018 = vmax.f32 %v2010, 0.0
    %v2019 = vmax.f32 %v2015, 0.0
    %v2020 = vld [vmem:[%s7] sm:$0xff]
    %v2021 = vld [vmem:[%s7 + $0x8] sm:$0xff]
    %v2022 = vld [vmem:[%s7 + $0x10] sm:$0xff]
    %v2023 = vld [vmem:[%s7 + $0x18] sm:$0xff]
    %v2024 = vlaneseq
    %v2025 = vshrl.u32 %v2024, 7
    %v2026 = vsub.s32 5, %v2025
    %v2027 = vrot.slane %v100, %v2026
    %v2029 = vsel %vm113, %v2018, 0
    %v2032 = vsel %vm113, %v2019, 0
    %2034 = vmatprep.subr.mxu0 0.0
    %2035 = vmatpush1.msra.mxu0 0.0
    %2036 = vmatprep.subr.mxu0 0.0
    %2037 = vmatpush1.msra.mxu0 0.0
    %2038 = vmatprep.subr.mxu0 0.0
    %2039 = vmatpush1.msra.mxu0 0.0
    %2040 = vmatprep.subr.mxu0 0.0
    %2041 = vmatpush1.msra.mxu0 0.0
    %2042 = vmatprep.subr.mxu0 0.0
    %2043 = vmatpush1.msra.mxu0 0.0
    %2044 = vmatprep.subr.mxu0 0.0
    %2045 = vmatpush1.msra.mxu0 0.0
    %2046 = vmatprep.subr.mxu0 0.0
    %2047 = vmatpush1.msra.mxu0 0.0
    %2048 = vmatprep.subr.mxu0 0.0
    %2049 = vmatpush1.msra.mxu0 0.0
    %2050 = vmatprep.subr.mxu0 0.0
    %2051 = vmatpush1.msra.mxu0 0.0
    %2052 = vmatprep.subr.mxu0 0.0
    %2053 = vmatpush1.msra.mxu0 0.0
    %2054 = vmatprep.subr.mxu0 0.0
    %2055 = vmatpush1.msra.mxu0 0.0
    %2056 = vmatprep.subr.mxu0 0.0
    %2057 = vmatpush1.msra.mxu0 0.0
    %2058 = vmatprep.subr.mxu0 0.0
    %2059 = vmatpush1.msra.mxu0 %v2023
    %2060 = vmatprep.subr.mxu0 0.0
    %2061 = vmatpush1.msra.mxu0 %v2022
    %2062 = vmatprep.subr.mxu0 0.0
    %2063 = vmatpush1.msra.mxu0 %v2021
    %2064 = vmatprep.subr.mxu0 0.0
    %2065 = vmatpush1.msra.mxu0 %v2020
    %2066 = vmatprep.subr.mxu0 0.0
    %2067 = vmatpush2.msra.mxu0 0.0
    %2068 = vmatprep.subr.mxu0 0.0
    %2069 = vmatpush2.msra.mxu0 0.0
    %2070 = vmatprep.subr.mxu0 0.0
    %2071 = vmatpush2.msra.mxu0 0.0
    %2072 = vmatprep.subr.mxu0 0.0
    %2073 = vmatpush2.msra.mxu0 0.0
    %2074 = vmatprep.subr.mxu0 0.0
    %2075 = vmatpush2.msra.mxu0 0.0
    %2076 = vmatprep.subr.mxu0 0.0
    %2077 = vmatpush2.msra.mxu0 0.0
    %2078 = vmatprep.subr.mxu0 0.0
    %2079 = vmatpush2.msra.mxu0 0.0
    %2080 = vmatprep.subr.mxu0 0.0
    %2081 = vmatpush2.msra.mxu0 0.0
    %2082 = vmatprep.subr.mxu0 0.0
    %2083 = vmatpush2.msra.mxu0 0.0
    %2084 = vmatprep.subr.mxu0 0.0
    %2085 = vmatpush2.msra.mxu0 0.0
    %2086 = vmatprep.subr.mxu0 0.0
    %2087 = vmatpush2.msra.mxu0 0.0
    %2088 = vmatprep.subr.mxu0 0.0
    %2089 = vmatpush2.msra.mxu0 0.0
    %2090 = vmatprep.subr.mxu0 0.0
    %2091 = vmatpush2.msra.mxu0 0.0
    %2092 = vmatprep.subr.mxu0 0.0
    %2093 = vmatpush2.msra.mxu0 0.0
    %2094 = vmatprep.subr.mxu0 0.0
    %2095 = vmatpush2.msra.mxu0 0.0
    %2096 = vmatprep.subr.mxu0 0.0
    %2097 = vmatpush2.msra.mxu0 0.0
    %2098 = vmatprep.mubr.f32.mxu0 0.0
    %2099 = vmatmul.mubr.f32.gmra.mxu0 %v2029
    %v2100 = vpop.f32.mrf.mxu0
    %v2101 = vadd.f32 %v2027, %v2100
    %v2102 = vpop.f32.mrf.mxu0
    %2103 = vmatprep.mubr.f32.mxu0 0.0
    %2104 = vmatmul.mubr.f32.gmra.mxu0 %v2032
    %v2105 = vpop.f32.mrf.mxu0
    %v2106 = vadd.f32 %v2027, %v2105
    %v2107 = vpop.f32.mrf.mxu0
    %2108 = vdwg.mxu0
    %v2109 = vmax.f32 %v2101, 0.0
    %v2110 = vmax.f32 %v2106, 0.0
    %2112 = vset.pattern.permute.xlu0 0
    %2113 = vperm.xlu0 %2112, %v100
    %v2114 = vpop.permute.xlu0 %2113
    %v2115 = vrot.slane %v100, 7
    %v2116 = vrot.slane %v2114, 6
    %vm2118 = vcmask 130048
    %v2119 = vsel %vm2118, %v2115, 0
    %v2122 = vsel %vm2118, %v2109, 0
    %v2125 = vsel %vm2118, %v2110, 0
    %2127 = vmatprep.subr.mxu0 0.0
    %2128 = vmatpush1.xpose.msra.mxu0 0.0
    %2129 = vmatprep.subr.mxu0 0.0
    %2130 = vmatpush1.xpose.msra.mxu0 0.0
    %2131 = vmatprep.subr.mxu0 0.0
    %2132 = vmatpush1.xpose.msra.mxu0 0.0
    %2133 = vmatprep.subr.mxu0 0.0
    %2134 = vmatpush1.xpose.msra.mxu0 0.0
    %2135 = vmatprep.subr.mxu0 0.0
    %2136 = vmatpush1.xpose.msra.mxu0 0.0
    %2137 = vmatprep.subr.mxu0 0.0
    %2138 = vmatpush1.xpose.msra.mxu0 0.0
    %2139 = vmatprep.subr.mxu0 0.0
    %2140 = vmatpush1.xpose.msra.mxu0 0.0
    %2141 = vmatprep.subr.mxu0 0.0
    %2142 = vmatpush1.xpose.msra.mxu0 0.0
    %2143 = vmatprep.subr.mxu0 0.0
    %2144 = vmatpush1.xpose.msra.mxu0 0.0
    %2145 = vmatprep.subr.mxu0 0.0
    %2146 = vmatpush1.xpose.msra.mxu0 0.0
    %2147 = vmatprep.subr.mxu0 0.0
    %2148 = vmatpush1.xpose.msra.mxu0 0.0
    %2149 = vmatprep.subr.mxu0 0.0
    %2150 = vmatpush1.xpose.msra.mxu0 0.0
    %2151 = vmatprep.subr.mxu0 0.0
    %2152 = vmatpush1.xpose.msra.mxu0 0.0
    %2153 = vmatprep.subr.mxu0 0.0
    %2154 = vmatpush1.xpose.msra.mxu0 0.0
    %2155 = vmatprep.subr.mxu0 0.0
    %2156 = vmatpush1.xpose.msra.mxu0 %v2125
    %2157 = vmatprep.subr.mxu0 0.0
    %2158 = vmatpush1.xpose.msra.mxu0 %v2122
    %2159 = vmatprep.subr.mxu0 0.0
    %2160 = vmatpush2.xpose.msra.mxu0 0.0
    %2161 = vmatprep.subr.mxu0 0.0
    %2162 = vmatpush2.xpose.msra.mxu0 0.0
    %2163 = vmatprep.subr.mxu0 0.0
    %2164 = vmatpush2.xpose.msra.mxu0 0.0
    %2165 = vmatprep.subr.mxu0 0.0
    %2166 = vmatpush2.xpose.msra.mxu0 0.0
    %2167 = vmatprep.subr.mxu0 0.0
    %2168 = vmatpush2.xpose.msra.mxu0 0.0
    %2169 = vmatprep.subr.mxu0 0.0
    %2170 = vmatpush2.xpose.msra.mxu0 0.0
    %2171 = vmatprep.subr.mxu0 0.0
    %2172 = vmatpush2.xpose.msra.mxu0 0.0
    %2173 = vmatprep.subr.mxu0 0.0
    %2174 = vmatpush2.xpose.msra.mxu0 0.0
    %2175 = vmatprep.subr.mxu0 0.0
    %2176 = vmatpush2.xpose.msra.mxu0 0.0
    %2177 = vmatprep.subr.mxu0 0.0
    %2178 = vmatpush2.xpose.msra.mxu0 0.0
    %2179 = vmatprep.subr.mxu0 0.0
    %2180 = vmatpush2.xpose.msra.mxu0 0.0
    %2181 = vmatprep.subr.mxu0 0.0
    %2182 = vmatpush2.xpose.msra.mxu0 0.0
    %2183 = vmatprep.subr.mxu0 0.0
    %2184 = vmatpush2.xpose.msra.mxu0 0.0
    %2185 = vmatprep.subr.mxu0 0.0
    %2186 = vmatpush2.xpose.msra.mxu0 0.0
    %2187 = vmatprep.subr.mxu0 0.0
    %2188 = vmatpush2.xpose.msra.mxu0 0.0
    %2189 = vmatprep.subr.mxu0 0.0
    %2190 = vmatpush2.xpose.msra.mxu0 0.0
    %2191 = vmatprep.mubr.f32.mxu0 0.0
    %2192 = vmatmul.mubr.f32.gmra.mxu0 %v2119
    %v2193 = vpop.f32.mrf.mxu0
    %v2194 = vadd.f32 %v2116, %v2193
    %v2195 = vpop.f32.mrf.mxu0
    %2196 = vdwg.mxu0
    %v2197 = vxor.u32 %v2194, 2147483648
    %v2198 = vmul.f32 %v2197, 1.442695
    %v2199 = vpow.pop %v2198
    %v2200 = vadd.f32 %v2199, 1.0
    %v2201 = vrcp.pop %v2200
    %v2202 = vmul.f32 1.0, %v2201
    %vm2203 = vcmask 122880
    %2204 = vst.msk [vmem:[#allocation14] sm:$0x1] %vm2203, %v2202
    // Predicated region
    $region58: #{tpu_custom_call.1} parent=1 // pred_check
      _
    $region59: #{tpu_custom_call.1} parent=1 // pred_check_branch
      %2206 = sbr.rel (0) target = $region61
    $region60: #{tpu_custom_call.1} parent=1 // pred_region
      %s2208 = ssub.s32 16, 16
      %2209 = vsyncadd [#allocation7], %s2208
      %s2211 = sshll.u32 [#allocation14], 4
      %s2212 = int_to_ptr.vmem [resolvable:$true] %s2211
      %2214 = dma.vmem_to_hbm [thread:$0]  %s2212, 16, %s9, [#allocation7]
    $region61: #{tpu_custom_call.1} parent=1 // pred_fallthru
      _
    // Predicated region
    $region62: #{tpu_custom_call.1} parent=1 // pred_check
      _
    $region63: #{tpu_custom_call.1} parent=1 // pred_check_branch
      %2216 = sbr.rel (0) target = $region65
    $region64: #{tpu_custom_call.1} parent=1 // pred_region
      %2217 = dma.done [#allocation7], 16
    $region65: #{tpu_custom_call.1} parent=1 // pred_fallthru
      _
    %2218 = vsyncpa [#allocation6], 1
    %2219 = vsyncpa [#allocation9], 1
    %2220 = vsyncpa [#allocation12], 1
    %2221 = vsyncpa [#allocation7], 1

</llo_original>
